<compile_context>
chip_gen: v7x
topology: tpu7x:2x2x1
jax: 0.10.0
libtpu: 0.0.40
codegen_flags: <defaults>
</compile_context>

<pallas_src>
import numpy as np
import jax
import jax.numpy as jnp
from jax.experimental import pallas as pl
from jax.experimental.pallas import tpu as pltpu


# ----------------------------- model hyper-params -----------------------------
SIGMA_MIN = 0.002
SIGMA_MAX = 80.0
RHO = 7.0
SIGMA_DATA = 0.5

B = 2          # batch
C = 16         # n_feats (mel bins)
T = 64         # time frames
H = 64         # hidden size of the stand-in estimator MLP

LANE = 128     # TPU lane width


# --------------------------------- Pallas kernel -------------------------------
def _mish(h):
    # x * tanh(softplus(x)).  With e = exp(x):
    #   tanh(log(1+e)) = ((1+e)^2 - 1) / ((1+e)^2 + 1) = e*(2+e) / (e*(2+e) + 2)
    # e*(2+e) avoids the (1+e)^2-1 cancellation for very negative h.
    # Single EUP exp + approx reciprocal (error ~2^-12, fine for the stand-in).
    e = jnp.exp(jnp.minimum(h, 20.0))
    num = e * (2.0 + e)
    return h * num * pl.reciprocal(num + 2.0, approx=True)


def _make_sampler_kernel(step_consts, t0, any_noise):
    """Fully fused EDM Heun sampler.

    step_consts: list of per-step tuples
        (c_in_hat, c_skip_hat, c_out_hat, c_in_nxt, c_skip_nxt, c_out_nxt,
         dt, 1/t_hat, 1/t_next, noise_scale)
    baked in as compile-time constants (n_steps is static).
    """
    n_steps = len(step_consts)

    def kernel(z_ref, cproj_ref, mask_ref, temb_ref, w1t_ref, w2t_ref, b2_ref,
               *rest):
        if any_noise:
            noise_ref, out_ref = rest          # (n_steps, C, Lt), (C, Lt)
        else:
            (out_ref,) = rest                  # (C, Lt)

        # ---- loop-invariant loads / broadcasts, hoisted once ----
        cproj = cproj_ref[...]                                    # (H, Lt) f32
        w1t = w1t_ref[...]                                        # (H, C)  bf16
        w2t = w2t_ref[...]                                        # (C, H)  bf16
        mask_b = jnp.broadcast_to(mask_ref[...], out_ref.shape)   # (C, Lt) f32
        b2_b = jnp.broadcast_to(b2_ref[...], out_ref.shape)       # (C, Lt) f32

        def denoise(x, c_in, c_skip, c_out, temb_col):
            # D_x = c_skip*x + c_out * F(c_in*x, c_noise, cond, mask)
            h = (jnp.dot(w1t, (c_in * x).astype(jnp.bfloat16),
                         preferred_element_type=jnp.float32)
                 + cproj + temb_col)                               # (H, Lt)
            h = _mish(h)
            f = (jnp.dot(w2t, h.astype(jnp.bfloat16),
                         preferred_element_type=jnp.float32) + b2_b) * mask_b
            return c_skip * x + c_out * f                          # (C, Lt)

        # ---- Heun sampler, statically unrolled over the step axis ----
        x = z_ref[...] * t0                                        # x_next init
        for s in range(n_steps):
            (ci_h, cs_h, co_h, ci_n, cs_n, co_n,
             dt, inv_th, inv_tn, ns) = step_consts[s]

            x_hat = x
            if any_noise and ns > 0.0:
                # x_hat = x_cur + sqrt(t_hat^2 - t_cur^2) * S_noise * eps
                x_hat = x_hat + ns * noise_ref[s]

            d1 = denoise(x_hat, ci_h, cs_h, co_h,
                         temb_ref[:, 2 * s:2 * s + 1])
            d_cur = (x_hat - d1) * inv_th
            x_mid = x_hat + dt * d_cur

            d2 = denoise(x_mid, ci_n, cs_n, co_n,
                         temb_ref[:, 2 * s + 1:2 * s + 2])
            d_prime = (x_mid - d2) * inv_tn

            x = x_hat + dt * (0.5 * d_cur + 0.5 * d_prime)

        out_ref[...] = x

    return kernel


# --------------------------- EDM Heun sampler wrapper ---------------------------
def reverse_diffusion(z_nct, x_mask_n1t, mu_nct, n_timesteps, params, key,
                      S_churn=0.0, S_min=0.0, S_max=float("inf"), S_noise=1.0):
    assert n_timesteps >= 2
    w1a, w1b, b1, w2, b2 = params
    Bb, Cc, Tt = z_nct.shape
    Hh = w1a.shape[1]
    n_steps = n_timesteps - 1

    # --- lane-dense layout: (features, B*T frames on lanes), zero-padded ---
    L = Bb * Tt
    Lp = -(-L // LANE) * LANE

    def to_cl(a):  # (B, C', T) -> (C', B*T) padded to Lp lanes
        flat = jnp.transpose(a, (1, 0, 2)).reshape(a.shape[1], L)
        return jnp.pad(flat.astype(jnp.float32), ((0, 0), (0, Lp - L)))

    z_cl = to_cl(z_nct)                                       # (C, Lp)
    mu_cl = to_cl(mu_nct)                                     # (C, Lp)
    mask_1l = to_cl(x_mask_n1t)                               # (1, Lp)

    # Loop-invariant conditioning projection, hoisted out of the sampler loop.
    cproj = (jnp.einsum("ch,cl->hl", w1b.astype(jnp.float32), mu_cl)
             + b1.astype(jnp.float32).reshape(Hh, 1))         # (H, Lp)

    # --- host-side EDM sigma schedule (exactly as in the PyTorch module) ---
    step_idx = np.arange(n_timesteps, dtype=np.float64)
    t_steps = (SIGMA_MAX ** (1.0 / RHO)
               + step_idx / (n_timesteps - 1)
               * (SIGMA_MIN ** (1.0 / RHO) - SIGMA_MAX ** (1.0 / RHO))) ** RHO

    half = Hh // 2
    freqs = np.exp(-np.log(10000.0) * np.arange(half) / half)

    def edm(sig):
        c_skip = SIGMA_DATA ** 2 / (sig ** 2 + SIGMA_DATA ** 2)
        c_out = sig * SIGMA_DATA / np.sqrt(sig ** 2 + SIGMA_DATA ** 2)
        c_in = 1.0 / np.sqrt(SIGMA_DATA ** 2 + sig ** 2)
        c_noise = np.log(sig) / 4.0
        temb = np.concatenate([np.sin(c_noise * freqs), np.cos(c_noise * freqs)])
        return c_in, c_skip, c_out, temb.astype(np.float32)

    step_consts = []
    temb_cols = np.zeros((Hh, 2 * n_steps), np.float32)
    any_noise = False
    for i in range(n_steps):
        t_cur, t_next = float(t_steps[i]), float(t_steps[i + 1])
        gamma = (min(S_churn / n_timesteps, np.sqrt(2.0) - 1.0)
                 if (S_min <= t_cur <= S_max) else 0.0)
        t_hat = t_cur + gamma * t_cur
        ns = float(np.sqrt(max(t_hat ** 2 - t_cur ** 2, 0.0)) * S_noise)
        any_noise = any_noise or (ns > 0.0)
        ci_h, cs_h, co_h, te_h = edm(t_hat)
        ci_n, cs_n, co_n, te_n = edm(t_next)
        step_consts.append((float(ci_h), float(cs_h), float(co_h),
                            float(ci_n), float(cs_n), float(co_n),
                            float(t_next - t_hat), float(1.0 / t_hat),
                            float(1.0 / t_next), ns))
        temb_cols[:, 2 * i] = te_h
        temb_cols[:, 2 * i + 1] = te_n
    t0 = float(t_steps[0])
    temb_cols = jnp.asarray(temb_cols)                        # (H, 2*n_steps)

    # Transposed weights for the lane-dense matmuls.
    w1t = jnp.transpose(w1a).astype(jnp.bfloat16)             # (H, C)
    w2t = jnp.transpose(w2).astype(jnp.bfloat16)              # (C, H)
    b2c = b2.astype(jnp.float32).reshape(Cc, 1)               # (C, 1)

    # Lane-dimension tiling: one block at demo size; splits into parallel
    # blocks for larger B*T so v7x's second TensorCore gets work.
    lane_tile = Lp
    if Lp > 512:
        for cand in (512, 384, 256, 128):
            if Lp % cand == 0:
                lane_tile = cand
                break
    num_blocks = Lp // lane_tile

    const2 = lambda li: (0, 0)
    in_specs = [
        pl.BlockSpec((Cc, lane_tile), lambda li: (0, li)),      # z
        pl.BlockSpec((Hh, lane_tile), lambda li: (0, li)),      # cond projection
        pl.BlockSpec((1, lane_tile), lambda li: (0, li)),       # mask
        pl.BlockSpec((Hh, 2 * n_steps), const2),                # temb table (resident)
        pl.BlockSpec((Hh, Cc), const2),                         # w1ᵀ (bf16)
        pl.BlockSpec((Cc, Hh), const2),                         # w2ᵀ (bf16)
        pl.BlockSpec((Cc, 1), const2),                          # b2 column
    ]
    args = [z_cl, cproj, mask_1l, temb_cols, w1t, w2t, b2c]

    if any_noise:
        # Pre-generate all churn noise once, fully VMEM-resident per lane block.
        key, sub = jax.random.split(key)
        noise = jax.random.normal(sub, (n_steps, Cc, Lp), jnp.float32)
        in_specs.append(
            pl.BlockSpec((n_steps, Cc, lane_tile), lambda li: (0, 0, li)))
        args.append(noise)

    out_cl = pl.pallas_call(
        _make_sampler_kernel(step_consts, t0, any_noise),
        out_shape=jax.ShapeDtypeStruct((Cc, Lp), jnp.float32),
        grid=(num_blocks,),
        in_specs=in_specs,
        out_specs=pl.BlockSpec((Cc, lane_tile), lambda li: (0, li)),
        compiler_params=pltpu.CompilerParams(
            dimension_semantics=("parallel",),
            vmem_limit_bytes=32 * 1024 * 1024),
    )(*args)

    # Back to PyTorch NCT layout.
    out = out_cl[:, :L].reshape(Cc, Bb, Tt)
    return jnp.transpose(out, (1, 0, 2))


# ------------------------------------ main -------------------------------------
if __name__ == "__main__":
    key = jax.random.PRNGKey(0)
    k_z, k_mu, k_w1a, k_w1b, k_w2, k_noise = jax.random.split(key, 6)

    # Deterministic stand-in estimator parameters.
    w1a = jax.random.normal(k_w1a, (C, H), jnp.float32) * 0.05
    w1b = jax.random.normal(k_w1b, (C, H), jnp.float32) * 0.05
    b1 = jnp.zeros((1, H), jnp.float32)
    w2 = jax.random.normal(k_w2, (H, C), jnp.float32) * 0.05
    b2 = jnp.zeros((1, C), jnp.float32)
    params = (w1a, w1b, b1, w2, b2)

    # Inputs in PyTorch convention: z, mu: (B, n_feats, T); x_mask: (B, 1, T).
    z = jax.random.normal(k_z, (B, C, T), jnp.float32)
    mu = jax.random.normal(k_mu, (B, C, T), jnp.float32)
    x_mask = jnp.ones((B, 1, T), jnp.float32)

    out = reverse_diffusion(z, x_mask, mu, n_timesteps=4, params=params, key=k_noise)
    out = jax.block_until_ready(out)
    assert out.shape == (B, C, T) and out.dtype == jnp.float32
    assert bool(jnp.all(jnp.isfinite(out)))
    print("KERNEL_OK")
</pallas_src>

<mosaic_0001>
module attributes {stable_mosaic.version = 11 : i64} {
  func.func @kernel(%arg0: i32, %arg1: memref<16x128xf32, #tpu.memory_space<vmem>>, %arg2: memref<64x128xf32, #tpu.memory_space<vmem>>, %arg3: memref<1x128xf32, #tpu.memory_space<vmem>>, %arg4: memref<64x6xf32, #tpu.memory_space<vmem>>, %arg5: memref<64x16xbf16, #tpu.memory_space<vmem>>, %arg6: memref<16x64xbf16, #tpu.memory_space<vmem>>, %arg7: memref<16x1xf32, #tpu.memory_space<vmem>>, %arg8: memref<16x128xf32, #tpu.memory_space<vmem>>) attributes {dimension_semantics = [#tpu.dimension_semantics<parallel>], iteration_bounds = array<i64: 1>, scalar_prefetch = 0 : i64, scratch_operands = 0 : i64, tpu.core_type = #tpu.core_type<tc>, window_params = [{transform_indices = @transform_0, window_bounds = array<i64: 16, 128>}, {transform_indices = @transform_1, window_bounds = array<i64: 64, 128>}, {transform_indices = @transform_2, window_bounds = array<i64: 1, 128>}, {pipeline_mode = #tpu.pipeline_mode<synchronous>, transform_indices = @transform_3, window_bounds = array<i64: 64, 6>}, {pipeline_mode = #tpu.pipeline_mode<synchronous>, transform_indices = @transform_4, window_bounds = array<i64: 64, 16>}, {pipeline_mode = #tpu.pipeline_mode<synchronous>, transform_indices = @transform_5, window_bounds = array<i64: 16, 64>}, {pipeline_mode = #tpu.pipeline_mode<synchronous>, transform_indices = @transform_6, window_bounds = array<i64: 16, 1>}, {transform_indices = @transform_7, window_bounds = array<i64: 16, 128>}]} {
    %c0 = arith.constant 0 : index
    %c0_0 = arith.constant 0 : index
    %0 = vector.load %arg2[%c0, %c0_0] : memref<64x128xf32, #tpu.memory_space<vmem>>, vector<64x128xf32>
    %c0_1 = arith.constant 0 : index
    %c0_2 = arith.constant 0 : index
    %1 = vector.load %arg5[%c0_1, %c0_2] : memref<64x16xbf16, #tpu.memory_space<vmem>>, vector<64x16xbf16>
    %c0_3 = arith.constant 0 : index
    %c0_4 = arith.constant 0 : index
    %2 = vector.load %arg6[%c0_3, %c0_4] : memref<16x64xbf16, #tpu.memory_space<vmem>>, vector<16x64xbf16>
    %c0_5 = arith.constant 0 : index
    %c0_6 = arith.constant 0 : index
    %3 = vector.load %arg3[%c0_5, %c0_6] : memref<1x128xf32, #tpu.memory_space<vmem>>, vector<1x128xf32>
    %4 = vector.shape_cast %3 : vector<1x128xf32> to vector<1x128xf32>
    %5 = vector.broadcast %4 : vector<1x128xf32> to vector<16x128xf32>
    %c0_7 = arith.constant 0 : index
    %c0_8 = arith.constant 0 : index
    %6 = vector.load %arg7[%c0_7, %c0_8] : memref<16x1xf32, #tpu.memory_space<vmem>>, vector<16x1xf32>
    %7 = vector.shape_cast %6 : vector<16x1xf32> to vector<16x1xf32>
    %8 = vector.broadcast %7 : vector<16x1xf32> to vector<16x128xf32>
    %c0_9 = arith.constant 0 : index
    %c0_10 = arith.constant 0 : index
    %9 = vector.load %arg1[%c0_9, %c0_10] : memref<16x128xf32, #tpu.memory_space<vmem>>, vector<16x128xf32>
    %cst = arith.constant 8.000000e+01 : f32
    %10 = vector.broadcast %cst : f32 to vector<16x128xf32>
    %11 = arith.mulf %9, %10 : vector<16x128xf32>
    %c0_11 = arith.constant 0 : index
    %c0_12 = arith.constant 0 : index
    %12 = vector.load %arg4[%c0_11, %c0_12] : memref<64x6xf32, #tpu.memory_space<vmem>>, vector<64x1xf32>
    %cst_13 = arith.constant 0.0124997562 : f32
    %13 = vector.broadcast %cst_13 : f32 to vector<16x128xf32>
    %14 = arith.mulf %13, %11 : vector<16x128xf32>
    %15 = arith.truncf %14 : vector<16x128xf32> to vector<16x128xbf16>
    %cst_14 = arith.constant dense<0.000000e+00> : vector<64x128xf32>
    %16 = tpu.matmul %1, %15, %cst_14 {dimension_numbers = #tpu.dot_dimension_numbers<[1], [0], [0], [1], [0, 0, 1, 1], [], []>} : vector<64x16xbf16>, vector<16x128xbf16>, vector<64x128xf32> -> vector<64x128xf32>
    %17 = arith.addf %16, %0 : vector<64x128xf32>
    %18 = vector.broadcast %12 : vector<64x1xf32> to vector<64x128xf32>
    %19 = arith.addf %17, %18 : vector<64x128xf32>
    %cst_15 = arith.constant 2.000000e+01 : f32
    %20 = vector.broadcast %cst_15 : f32 to vector<64x128xf32>
    %21 = arith.minimumf %19, %20 : vector<64x128xf32>
    %22 = math.exp %21 : vector<64x128xf32>
    %cst_16 = arith.constant 2.000000e+00 : f32
    %23 = vector.broadcast %cst_16 : f32 to vector<64x128xf32>
    %24 = arith.addf %23, %22 : vector<64x128xf32>
    %25 = arith.mulf %22, %24 : vector<64x128xf32>
    %26 = arith.mulf %19, %25 : vector<64x128xf32>
    %cst_17 = arith.constant 2.000000e+00 : f32
    %27 = vector.broadcast %cst_17 : f32 to vector<64x128xf32>
    %28 = arith.addf %25, %27 : vector<64x128xf32>
    %29 = tpu.reciprocal %28 {approx = true} : vector<64x128xf32> -> vector<64x128xf32>
    %30 = arith.mulf %26, %29 : vector<64x128xf32>
    %31 = arith.truncf %30 : vector<64x128xf32> to vector<64x128xbf16>
    %cst_18 = arith.constant dense<0.000000e+00> : vector<16x128xf32>
    %32 = tpu.matmul %2, %31, %cst_18 {dimension_numbers = #tpu.dot_dimension_numbers<[1], [0], [0], [1], [0, 0, 1, 1], [], []>} : vector<16x64xbf16>, vector<64x128xbf16>, vector<16x128xf32> -> vector<16x128xf32>
    %33 = arith.addf %32, %8 : vector<16x128xf32>
    %34 = arith.mulf %33, %5 : vector<16x128xf32>
    %cst_19 = arith.constant 3.90609748E-5 : f32
    %35 = vector.broadcast %cst_19 : f32 to vector<16x128xf32>
    %36 = arith.mulf %35, %11 : vector<16x128xf32>
    %cst_20 = arith.constant 0.499990225 : f32
    %37 = vector.broadcast %cst_20 : f32 to vector<16x128xf32>
    %38 = arith.mulf %37, %34 : vector<16x128xf32>
    %39 = arith.addf %36, %38 : vector<16x128xf32>
    %40 = arith.subf %11, %39 : vector<16x128xf32>
    %cst_21 = arith.constant 1.250000e-02 : f32
    %41 = vector.broadcast %cst_21 : f32 to vector<16x128xf32>
    %42 = arith.mulf %40, %41 : vector<16x128xf32>
    %cst_22 = arith.constant -7.027680e+01 : f32
    %43 = vector.broadcast %cst_22 : f32 to vector<16x128xf32>
    %44 = arith.mulf %43, %42 : vector<16x128xf32>
    %45 = arith.addf %11, %44 : vector<16x128xf32>
    %c0_23 = arith.constant 0 : index
    %c1 = arith.constant 1 : index
    %46 = vector.load %arg4[%c0_23, %c1] : memref<64x6xf32, #tpu.memory_space<vmem>>, vector<64x1xf32>
    %cst_24 = arith.constant 0.102711074 : f32
    %47 = vector.broadcast %cst_24 : f32 to vector<16x128xf32>
    %48 = arith.mulf %47, %45 : vector<16x128xf32>
    %49 = arith.truncf %48 : vector<16x128xf32> to vector<16x128xbf16>
    %cst_25 = arith.constant dense<0.000000e+00> : vector<64x128xf32>
    %50 = tpu.matmul %1, %49, %cst_25 {dimension_numbers = #tpu.dot_dimension_numbers<[1], [0], [0], [1], [0, 0, 1, 1], [], []>} : vector<64x16xbf16>, vector<16x128xbf16>, vector<64x128xf32> -> vector<64x128xf32>
    %51 = arith.addf %50, %0 : vector<64x128xf32>
    %52 = vector.broadcast %46 : vector<64x1xf32> to vector<64x128xf32>
    %53 = arith.addf %51, %52 : vector<64x128xf32>
    %cst_26 = arith.constant 2.000000e+01 : f32
    %54 = vector.broadcast %cst_26 : f32 to vector<64x128xf32>
    %55 = arith.minimumf %53, %54 : vector<64x128xf32>
    %56 = math.exp %55 : vector<64x128xf32>
    %cst_27 = arith.constant 2.000000e+00 : f32
    %57 = vector.broadcast %cst_27 : f32 to vector<64x128xf32>
    %58 = arith.addf %57, %56 : vector<64x128xf32>
    %59 = arith.mulf %56, %58 : vector<64x128xf32>
    %60 = arith.mulf %53, %59 : vector<64x128xf32>
    %cst_28 = arith.constant 2.000000e+00 : f32
    %61 = vector.broadcast %cst_28 : f32 to vector<64x128xf32>
    %62 = arith.addf %59, %61 : vector<64x128xf32>
    %63 = tpu.reciprocal %62 {approx = true} : vector<64x128xf32> -> vector<64x128xf32>
    %64 = arith.mulf %60, %63 : vector<64x128xf32>
    %65 = arith.truncf %64 : vector<64x128xf32> to vector<64x128xbf16>
    %cst_29 = arith.constant dense<0.000000e+00> : vector<16x128xf32>
    %66 = tpu.matmul %2, %65, %cst_29 {dimension_numbers = #tpu.dot_dimension_numbers<[1], [0], [0], [1], [0, 0, 1, 1], [], []>} : vector<16x64xbf16>, vector<64x128xbf16>, vector<16x128xf32> -> vector<16x128xf32>
    %67 = arith.addf %66, %8 : vector<16x128xf32>
    %68 = arith.mulf %67, %5 : vector<16x128xf32>
    %cst_30 = arith.constant 0.00263739098 : f32
    %69 = vector.broadcast %cst_30 : f32 to vector<16x128xf32>
    %70 = arith.mulf %69, %45 : vector<16x128xf32>
    %cst_31 = arith.constant 0.499340206 : f32
    %71 = vector.broadcast %cst_31 : f32 to vector<16x128xf32>
    %72 = arith.mulf %71, %68 : vector<16x128xf32>
    %73 = arith.addf %70, %72 : vector<16x128xf32>
    %74 = arith.subf %45, %73 : vector<16x128xf32>
    %cst_32 = arith.constant 0.102846786 : f32
    %75 = vector.broadcast %cst_32 : f32 to vector<16x128xf32>
    %76 = arith.mulf %74, %75 : vector<16x128xf32>
    %cst_33 = arith.constant 5.000000e-01 : f32
    %77 = vector.broadcast %cst_33 : f32 to vector<16x128xf32>
    %78 = arith.mulf %77, %42 : vector<16x128xf32>
    %cst_34 = arith.constant 5.000000e-01 : f32
    %79 = vector.broadcast %cst_34 : f32 to vector<16x128xf32>
    %80 = arith.mulf %79, %76 : vector<16x128xf32>
    %81 = arith.addf %78, %80 : vector<16x128xf32>
    %cst_35 = arith.constant -7.027680e+01 : f32
    %82 = vector.broadcast %cst_35 : f32 to vector<16x128xf32>
    %83 = arith.mulf %82, %81 : vector<16x128xf32>
    %84 = arith.addf %11, %83 : vector<16x128xf32>
    %c0_36 = arith.constant 0 : index
    %c2 = arith.constant 2 : index
    %85 = vector.load %arg4[%c0_36, %c2] : memref<64x6xf32, #tpu.memory_space<vmem>>, vector<64x1xf32>
    %cst_37 = arith.constant 0.102711074 : f32
    %86 = vector.broadcast %cst_37 : f32 to vector<16x128xf32>
    %87 = arith.mulf %86, %84 : vector<16x128xf32>
    %88 = arith.truncf %87 : vector<16x128xf32> to vector<16x128xbf16>
    %cst_38 = arith.constant dense<0.000000e+00> : vector<64x128xf32>
    %89 = tpu.matmul %1, %88, %cst_38 {dimension_numbers = #tpu.dot_dimension_numbers<[1], [0], [0], [1], [0, 0, 1, 1], [], []>} : vector<64x16xbf16>, vector<16x128xbf16>, vector<64x128xf32> -> vector<64x128xf32>
    %90 = arith.addf %89, %0 : vector<64x128xf32>
    %91 = vector.broadcast %85 : vector<64x1xf32> to vector<64x128xf32>
    %92 = arith.addf %90, %91 : vector<64x128xf32>
    %cst_39 = arith.constant 2.000000e+01 : f32
    %93 = vector.broadcast %cst_39 : f32 to vector<64x128xf32>
    %94 = arith.minimumf %92, %93 : vector<64x128xf32>
    %95 = math.exp %94 : vector<64x128xf32>
    %cst_40 = arith.constant 2.000000e+00 : f32
    %96 = vector.broadcast %cst_40 : f32 to vector<64x128xf32>
    %97 = arith.addf %96, %95 : vector<64x128xf32>
    %98 = arith.mulf %95, %97 : vector<64x128xf32>
    %99 = arith.mulf %92, %98 : vector<64x128xf32>
    %cst_41 = arith.constant 2.000000e+00 : f32
    %100 = vector.broadcast %cst_41 : f32 to vector<64x128xf32>
    %101 = arith.addf %98, %100 : vector<64x128xf32>
    %102 = tpu.reciprocal %101 {approx = true} : vector<64x128xf32> -> vector<64x128xf32>
    %103 = arith.mulf %99, %102 : vector<64x128xf32>
    %104 = arith.truncf %103 : vector<64x128xf32> to vector<64x128xbf16>
    %cst_42 = arith.constant dense<0.000000e+00> : vector<16x128xf32>
    %105 = tpu.matmul %2, %104, %cst_42 {dimension_numbers = #tpu.dot_dimension_numbers<[1], [0], [0], [1], [0, 0, 1, 1], [], []>} : vector<16x64xbf16>, vector<64x128xbf16>, vector<16x128xf32> -> vector<16x128xf32>
    %106 = arith.addf %105, %8 : vector<16x128xf32>
    %107 = arith.mulf %106, %5 : vector<16x128xf32>
    %cst_43 = arith.constant 0.00263739098 : f32
    %108 = vector.broadcast %cst_43 : f32 to vector<16x128xf32>
    %109 = arith.mulf %108, %84 : vector<16x128xf32>
    %cst_44 = arith.constant 0.499340206 : f32
    %110 = vector.broadcast %cst_44 : f32 to vector<16x128xf32>
    %111 = arith.mulf %110, %107 : vector<16x128xf32>
    %112 = arith.addf %109, %111 : vector<16x128xf32>
    %113 = arith.subf %84, %112 : vector<16x128xf32>
    %cst_45 = arith.constant 0.102846786 : f32
    %114 = vector.broadcast %cst_45 : f32 to vector<16x128xf32>
    %115 = arith.mulf %113, %114 : vector<16x128xf32>
    %cst_46 = arith.constant -9.25322246 : f32
    %116 = vector.broadcast %cst_46 : f32 to vector<16x128xf32>
    %117 = arith.mulf %116, %115 : vector<16x128xf32>
    %118 = arith.addf %84, %117 : vector<16x128xf32>
    %c0_47 = arith.constant 0 : index
    %c3 = arith.constant 3 : index
    %119 = vector.load %arg4[%c0_47, %c3] : memref<64x6xf32, #tpu.memory_space<vmem>>, vector<64x1xf32>
    %cst_48 = arith.constant 1.45728576 : f32
    %120 = vector.broadcast %cst_48 : f32 to vector<16x128xf32>
    %121 = arith.mulf %120, %118 : vector<16x128xf32>
    %122 = arith.truncf %121 : vector<16x128xf32> to vector<16x128xbf16>
    %cst_49 = arith.constant dense<0.000000e+00> : vector<64x128xf32>
    %123 = tpu.matmul %1, %122, %cst_49 {dimension_numbers = #tpu.dot_dimension_numbers<[1], [0], [0], [1], [0, 0, 1, 1], [], []>} : vector<64x16xbf16>, vector<16x128xbf16>, vector<64x128xf32> -> vector<64x128xf32>
    %124 = arith.addf %123, %0 : vector<64x128xf32>
    %125 = vector.broadcast %119 : vector<64x1xf32> to vector<64x128xf32>
    %126 = arith.addf %124, %125 : vector<64x128xf32>
    %cst_50 = arith.constant 2.000000e+01 : f32
    %127 = vector.broadcast %cst_50 : f32 to vector<64x128xf32>
    %128 = arith.minimumf %126, %127 : vector<64x128xf32>
    %129 = math.exp %128 : vector<64x128xf32>
    %cst_51 = arith.constant 2.000000e+00 : f32
    %130 = vector.broadcast %cst_51 : f32 to vector<64x128xf32>
    %131 = arith.addf %130, %129 : vector<64x128xf32>
    %132 = arith.mulf %129, %131 : vector<64x128xf32>
    %133 = arith.mulf %126, %132 : vector<64x128xf32>
    %cst_52 = arith.constant 2.000000e+00 : f32
    %134 = vector.broadcast %cst_52 : f32 to vector<64x128xf32>
    %135 = arith.addf %132, %134 : vector<64x128xf32>
    %136 = tpu.reciprocal %135 {approx = true} : vector<64x128xf32> -> vector<64x128xf32>
    %137 = arith.mulf %133, %136 : vector<64x128xf32>
    %138 = arith.truncf %137 : vector<64x128xf32> to vector<64x128xbf16>
    %cst_53 = arith.constant dense<0.000000e+00> : vector<16x128xf32>
    %139 = tpu.matmul %2, %138, %cst_53 {dimension_numbers = #tpu.dot_dimension_numbers<[1], [0], [0], [1], [0, 0, 1, 1], [], []>} : vector<16x64xbf16>, vector<64x128xbf16>, vector<16x128xf32> -> vector<16x128xf32>
    %140 = arith.addf %139, %8 : vector<16x128xf32>
    %141 = arith.mulf %140, %5 : vector<16x128xf32>
    %cst_54 = arith.constant 0.530920446 : f32
    %142 = vector.broadcast %cst_54 : f32 to vector<16x128xf32>
    %143 = arith.mulf %142, %118 : vector<16x128xf32>
    %cst_55 = arith.constant 0.342446893 : f32
    %144 = vector.broadcast %cst_55 : f32 to vector<16x128xf32>
    %145 = arith.mulf %144, %141 : vector<16x128xf32>
    %146 = arith.addf %143, %145 : vector<16x128xf32>
    %147 = arith.subf %118, %146 : vector<16x128xf32>
    %cst_56 = arith.constant 2.12775445 : f32
    %148 = vector.broadcast %cst_56 : f32 to vector<16x128xf32>
    %149 = arith.mulf %147, %148 : vector<16x128xf32>
    %cst_57 = arith.constant 5.000000e-01 : f32
    %150 = vector.broadcast %cst_57 : f32 to vector<16x128xf32>
    %151 = arith.mulf %150, %115 : vector<16x128xf32>
    %cst_58 = arith.constant 5.000000e-01 : f32
    %152 = vector.broadcast %cst_58 : f32 to vector<16x128xf32>
    %153 = arith.mulf %152, %149 : vector<16x128xf32>
    %154 = arith.addf %151, %153 : vector<16x128xf32>
    %cst_59 = arith.constant -9.25322246 : f32
    %155 = vector.broadcast %cst_59 : f32 to vector<16x128xf32>
    %156 = arith.mulf %155, %154 : vector<16x128xf32>
    %157 = arith.addf %84, %156 : vector<16x128xf32>
    %c0_60 = arith.constant 0 : index
    %c4 = arith.constant 4 : index
    %158 = vector.load %arg4[%c0_60, %c4] : memref<64x6xf32, #tpu.memory_space<vmem>>, vector<64x1xf32>
    %cst_61 = arith.constant 1.45728576 : f32
    %159 = vector.broadcast %cst_61 : f32 to vector<16x128xf32>
    %160 = arith.mulf %159, %157 : vector<16x128xf32>
    %161 = arith.truncf %160 : vector<16x128xf32> to vector<16x128xbf16>
    %cst_62 = arith.constant dense<0.000000e+00> : vector<64x128xf32>
    %162 = tpu.matmul %1, %161, %cst_62 {dimension_numbers = #tpu.dot_dimension_numbers<[1], [0], [0], [1], [0, 0, 1, 1], [], []>} : vector<64x16xbf16>, vector<16x128xbf16>, vector<64x128xf32> -> vector<64x128xf32>
    %163 = arith.addf %162, %0 : vector<64x128xf32>
    %164 = vector.broadcast %158 : vector<64x1xf32> to vector<64x128xf32>
    %165 = arith.addf %163, %164 : vector<64x128xf32>
    %cst_63 = arith.constant 2.000000e+01 : f32
    %166 = vector.broadcast %cst_63 : f32 to vector<64x128xf32>
    %167 = arith.minimumf %165, %166 : vector<64x128xf32>
    %168 = math.exp %167 : vector<64x128xf32>
    %cst_64 = arith.constant 2.000000e+00 : f32
    %169 = vector.broadcast %cst_64 : f32 to vector<64x128xf32>
    %170 = arith.addf %169, %168 : vector<64x128xf32>
    %171 = arith.mulf %168, %170 : vector<64x128xf32>
    %172 = arith.mulf %165, %171 : vector<64x128xf32>
    %cst_65 = arith.constant 2.000000e+00 : f32
    %173 = vector.broadcast %cst_65 : f32 to vector<64x128xf32>
    %174 = arith.addf %171, %173 : vector<64x128xf32>
    %175 = tpu.reciprocal %174 {approx = true} : vector<64x128xf32> -> vector<64x128xf32>
    %176 = arith.mulf %172, %175 : vector<64x128xf32>
    %177 = arith.truncf %176 : vector<64x128xf32> to vector<64x128xbf16>
    %cst_66 = arith.constant dense<0.000000e+00> : vector<16x128xf32>
    %178 = tpu.matmul %2, %177, %cst_66 {dimension_numbers = #tpu.dot_dimension_numbers<[1], [0], [0], [1], [0, 0, 1, 1], [], []>} : vector<16x64xbf16>, vector<64x128xbf16>, vector<16x128xf32> -> vector<16x128xf32>
    %179 = arith.addf %178, %8 : vector<16x128xf32>
    %180 = arith.mulf %179, %5 : vector<16x128xf32>
    %cst_67 = arith.constant 0.530920446 : f32
    %181 = vector.broadcast %cst_67 : f32 to vector<16x128xf32>
    %182 = arith.mulf %181, %157 : vector<16x128xf32>
    %cst_68 = arith.constant 0.342446893 : f32
    %183 = vector.broadcast %cst_68 : f32 to vector<16x128xf32>
    %184 = arith.mulf %183, %180 : vector<16x128xf32>
    %185 = arith.addf %182, %184 : vector<16x128xf32>
    %186 = arith.subf %157, %185 : vector<16x128xf32>
    %cst_69 = arith.constant 2.12775445 : f32
    %187 = vector.broadcast %cst_69 : f32 to vector<16x128xf32>
    %188 = arith.mulf %186, %187 : vector<16x128xf32>
    %cst_70 = arith.constant -0.467979044 : f32
    %189 = vector.broadcast %cst_70 : f32 to vector<16x128xf32>
    %190 = arith.mulf %189, %188 : vector<16x128xf32>
    %191 = arith.addf %157, %190 : vector<16x128xf32>
    %c0_71 = arith.constant 0 : index
    %c5 = arith.constant 5 : index
    %192 = vector.load %arg4[%c0_71, %c5] : memref<64x6xf32, #tpu.memory_space<vmem>>, vector<64x1xf32>
    %cst_72 = arith.constant 1.99998403 : f32
    %193 = vector.broadcast %cst_72 : f32 to vector<16x128xf32>
    %194 = arith.mulf %193, %191 : vector<16x128xf32>
    %195 = arith.truncf %194 : vector<16x128xf32> to vector<16x128xbf16>
    %cst_73 = arith.constant dense<0.000000e+00> : vector<64x128xf32>
    %196 = tpu.matmul %1, %195, %cst_73 {dimension_numbers = #tpu.dot_dimension_numbers<[1], [0], [0], [1], [0, 0, 1, 1], [], []>} : vector<64x16xbf16>, vector<16x128xbf16>, vector<64x128xf32> -> vector<64x128xf32>
    %197 = arith.addf %196, %0 : vector<64x128xf32>
    %198 = vector.broadcast %192 : vector<64x1xf32> to vector<64x128xf32>
    %199 = arith.addf %197, %198 : vector<64x128xf32>
    %cst_74 = arith.constant 2.000000e+01 : f32
    %200 = vector.broadcast %cst_74 : f32 to vector<64x128xf32>
    %201 = arith.minimumf %199, %200 : vector<64x128xf32>
    %202 = math.exp %201 : vector<64x128xf32>
    %cst_75 = arith.constant 2.000000e+00 : f32
    %203 = vector.broadcast %cst_75 : f32 to vector<64x128xf32>
    %204 = arith.addf %203, %202 : vector<64x128xf32>
    %205 = arith.mulf %202, %204 : vector<64x128xf32>
    %206 = arith.mulf %199, %205 : vector<64x128xf32>
    %cst_76 = arith.constant 2.000000e+00 : f32
    %207 = vector.broadcast %cst_76 : f32 to vector<64x128xf32>
    %208 = arith.addf %205, %207 : vector<64x128xf32>
    %209 = tpu.reciprocal %208 {approx = true} : vector<64x128xf32> -> vector<64x128xf32>
    %210 = arith.mulf %206, %209 : vector<64x128xf32>
    %211 = arith.truncf %210 : vector<64x128xf32> to vector<64x128xbf16>
    %cst_77 = arith.constant dense<0.000000e+00> : vector<16x128xf32>
    %212 = tpu.matmul %2, %211, %cst_77 {dimension_numbers = #tpu.dot_dimension_numbers<[1], [0], [0], [1], [0, 0, 1, 1], [], []>} : vector<16x64xbf16>, vector<64x128xbf16>, vector<16x128xf32> -> vector<16x128xf32>
    %213 = arith.addf %212, %8 : vector<16x128xf32>
    %214 = arith.mulf %213, %5 : vector<16x128xf32>
    %cst_78 = arith.constant 9.999840e-01 : f32
    %215 = vector.broadcast %cst_78 : f32 to vector<16x128xf32>
    %216 = arith.mulf %215, %191 : vector<16x128xf32>
    %cst_79 = arith.constant 0.00199998403 : f32
    %217 = vector.broadcast %cst_79 : f32 to vector<16x128xf32>
    %218 = arith.mulf %217, %214 : vector<16x128xf32>
    %219 = arith.addf %216, %218 : vector<16x128xf32>
    %220 = arith.subf %191, %219 : vector<16x128xf32>
    %cst_80 = arith.constant 5.000000e+02 : f32
    %221 = vector.broadcast %cst_80 : f32 to vector<16x128xf32>
    %222 = arith.mulf %220, %221 : vector<16x128xf32>
    %cst_81 = arith.constant 5.000000e-01 : f32
    %223 = vector.broadcast %cst_81 : f32 to vector<16x128xf32>
    %224 = arith.mulf %223, %188 : vector<16x128xf32>
    %cst_82 = arith.constant 5.000000e-01 : f32
    %225 = vector.broadcast %cst_82 : f32 to vector<16x128xf32>
    %226 = arith.mulf %225, %222 : vector<16x128xf32>
    %227 = arith.addf %224, %226 : vector<16x128xf32>
    %cst_83 = arith.constant -0.467979044 : f32
    %228 = vector.broadcast %cst_83 : f32 to vector<16x128xf32>
    %229 = arith.mulf %228, %227 : vector<16x128xf32>
    %230 = arith.addf %157, %229 : vector<16x128xf32>
    %c0_84 = arith.constant 0 : index
    %c0_85 = arith.constant 0 : index
    %231 = vector.load %arg8[%c0_84, %c0_85] : memref<16x128xf32, #tpu.memory_space<vmem>>, vector<16x128xf32>
    tpu.vector_store %arg8[%c0_84, %c0_85], %230 {strides = array<i32>} : memref<16x128xf32, #tpu.memory_space<vmem>>, vector<16x128xf32>,
    return
  }
  func.func @transform_0(%arg0: i32) -> (i32, i32) {
    %c0_i32 = arith.constant 0 : i32
    %c0_i32_0 = arith.constant 0 : i32
    return %c0_i32, %arg0 : i32, i32
  }
  func.func @transform_1(%arg0: i32) -> (i32, i32) {
    %c0_i32 = arith.constant 0 : i32
    %c0_i32_0 = arith.constant 0 : i32
    return %c0_i32, %arg0 : i32, i32
  }
  func.func @transform_2(%arg0: i32) -> (i32, i32) {
    %c0_i32 = arith.constant 0 : i32
    %c0_i32_0 = arith.constant 0 : i32
    return %c0_i32, %arg0 : i32, i32
  }
  func.func @transform_3(%arg0: i32) -> (i32, i32) {
    %c0_i32 = arith.constant 0 : i32
    %c0_i32_0 = arith.constant 0 : i32
    %c0_i32_1 = arith.constant 0 : i32
    return %c0_i32, %c0_i32_0 : i32, i32
  }
  func.func @transform_4(%arg0: i32) -> (i32, i32) {
    %c0_i32 = arith.constant 0 : i32
    %c0_i32_0 = arith.constant 0 : i32
    %c0_i32_1 = arith.constant 0 : i32
    return %c0_i32, %c0_i32_0 : i32, i32
  }
  func.func @transform_5(%arg0: i32) -> (i32, i32) {
    %c0_i32 = arith.constant 0 : i32
    %c0_i32_0 = arith.constant 0 : i32
    %c0_i32_1 = arith.constant 0 : i32
    return %c0_i32, %c0_i32_0 : i32, i32
  }
  func.func @transform_6(%arg0: i32) -> (i32, i32) {
    %c0_i32 = arith.constant 0 : i32
    %c0_i32_0 = arith.constant 0 : i32
    %c0_i32_1 = arith.constant 0 : i32
    return %c0_i32, %c0_i32_0 : i32, i32
  }
  func.func @transform_7(%arg0: i32) -> (i32, i32) {
    %c0_i32 = arith.constant 0 : i32
    %c0_i32_0 = arith.constant 0 : i32
    return %c0_i32, %arg0 : i32, i32
  }
}

</mosaic_0001>

<llo_original>
// kernel: tpu_custom_call.1
$region0: #{tpu_custom_call.1}
  #allocation0 [shape = 'u32[]', space=smem, size = 0x4, offset = 0x4, fixed_abs, tag = 'smem constant byte address 0x4 - core index']
  #allocation1 [shape = 'u32[144,128]{1,0:T(1,128)}', space=vmem, size = 0x12000, scoped, tag = 'internal scratch']
  %s0 = inlined_call_operand.vmem [shape: f32[16,128], index: 0, kind: input, shape index: {}]
  %s1 = inlined_call_operand.vmem [shape: f32[64,128], index: 1, kind: input, shape index: {}]
  %s2 = inlined_call_operand.vmem [shape: f32[1,128], index: 2, kind: input, shape index: {}]
  %s3 = inlined_call_operand.vmem [shape: f32[64,6], index: 3, kind: input, shape index: {}]
  %s4 = inlined_call_operand.vmem [shape: bf16[64,16], index: 4, kind: input, shape index: {}]
  %s5 = inlined_call_operand.vmem [shape: bf16[16,64], index: 5, kind: input, shape index: {}]
  %s6 = inlined_call_operand.vmem [shape: f32[16,1], index: 6, kind: input, shape index: {}]
  %s7 = inlined_call_operand.hbm [shape: f32[16,128], index: 7, kind: output, shape index: {}]
  %s8 = sld [smem:[#allocation0]]
  $region38: #{tpu_custom_call.1} parent=0
    _
  %s10 = ssub.s32 1, %s8
  %s11 = scalar_select 0, %s10, %s8
  $region1: #{tpu_custom_call.1} parent=0
    #allocation2 [shape = 'u8[8192]{0}', space=vmem, size = 0x2000, scoped, tag = 'output window, operand 0, single buffered']
    #allocation3 [shape = 's32[1]{0}', space=sflag, size = 0x4, scoped, tag = 'scoped memory for tpu_custom_call.1']
    %12 = vsyncpa [#allocation3], 0
    // Predicated region
    $region2: #{tpu_custom_call.1} parent=1 // pred_check
      _
    $region3: #{tpu_custom_call.1} parent=1 // pred_check_branch
      %14 = sbr.rel (0) target = $region5
    $region4: #{tpu_custom_call.1} parent=1 // pred_region
      _
    $region5: #{tpu_custom_call.1} parent=1 // pred_fallthru
      _
    // Predicated region
    $region6: #{tpu_custom_call.1} parent=1 // pred_check
      _
    $region7: #{tpu_custom_call.1} parent=1 // pred_check_branch
      %16 = sbr.rel (0) target = $region9
    $region8: #{tpu_custom_call.1} parent=1 // pred_region
      _
    $region9: #{tpu_custom_call.1} parent=1 // pred_fallthru
      _
    // Predicated region
    $region10: #{tpu_custom_call.1} parent=1 // pred_check
      _
    $region11: #{tpu_custom_call.1} parent=1 // pred_check_branch
      %18 = sbr.rel (0) target = $region13
    $region12: #{tpu_custom_call.1} parent=1 // pred_region
      _
    $region13: #{tpu_custom_call.1} parent=1 // pred_fallthru
      _
    // Predicated region
    $region14: #{tpu_custom_call.1} parent=1 // pred_check
      _
    $region15: #{tpu_custom_call.1} parent=1 // pred_check_branch
      %20 = sbr.rel (0) target = $region17
    $region16: #{tpu_custom_call.1} parent=1 // pred_region
      _
    $region17: #{tpu_custom_call.1} parent=1 // pred_fallthru
      _
    // Predicated region
    $region18: #{tpu_custom_call.1} parent=1 // pred_check
      _
    $region19: #{tpu_custom_call.1} parent=1 // pred_check_branch
      %22 = sbr.rel (0) target = $region21
    $region20: #{tpu_custom_call.1} parent=1 // pred_region
      _
    $region21: #{tpu_custom_call.1} parent=1 // pred_fallthru
      _
    // Predicated region
    $region22: #{tpu_custom_call.1} parent=1 // pred_check
      _
    $region23: #{tpu_custom_call.1} parent=1 // pred_check_branch
      %24 = sbr.rel (0) target = $region25
    $region24: #{tpu_custom_call.1} parent=1 // pred_region
      _
    $region25: #{tpu_custom_call.1} parent=1 // pred_fallthru
      _
    // Predicated region
    $region26: #{tpu_custom_call.1} parent=1 // pred_check
      _
    $region27: #{tpu_custom_call.1} parent=1 // pred_check_branch
      %26 = sbr.rel (0) target = $region29
    $region28: #{tpu_custom_call.1} parent=1 // pred_region
      _
    $region29: #{tpu_custom_call.1} parent=1 // pred_fallthru
      _
    %v28 = vld [vmem:[%s1] sm:$0xff]
    %v29 = vld [vmem:[%s1 + $0x8] sm:$0xff]
    %v30 = vld [vmem:[%s1 + $0x10] sm:$0xff]
    %v31 = vld [vmem:[%s1 + $0x18] sm:$0xff]
    %v32 = vld [vmem:[%s1 + $0x20] sm:$0xff]
    %v33 = vld [vmem:[%s1 + $0x28] sm:$0xff]
    %v34 = vld [vmem:[%s1 + $0x30] sm:$0xff]
    %v35 = vld [vmem:[%s1 + $0x38] sm:$0xff]
    %v36 = vld [vmem:[%s4] sm:$0xf]
    %v37 = vld [vmem:[%s4 + $0x4] sm:$0xf]
    %v38 = vld [vmem:[%s4 + $0x8] sm:$0xf]
    %v39 = vld [vmem:[%s4 + $0xc] sm:$0xf]
    %v40 = vld [vmem:[%s4 + $0x10] sm:$0xf]
    %v41 = vld [vmem:[%s4 + $0x14] sm:$0xf]
    %v42 = vld [vmem:[%s4 + $0x18] sm:$0xf]
    %v43 = vld [vmem:[%s4 + $0x1c] sm:$0xf]
    %v44 = vld [vmem:[%s5] sm:$0xf]
    %v45 = vld [vmem:[%s5 + $0x4] sm:$0xf]
    %v46 = vld [vmem:[%s2] sm:$0x1]
    %v48 = vlaneseq
    %v49 = vshrl.u32 %v48, 7
    %v50 = vsub.s32 0, %v49
    %v51 = vrot.slane %v46, %v50
    %v53 = vld [vmem:[%s6] sm:$0xff]
    %v54 = vld [vmem:[%s6 + $0x8] sm:$0xff]
    %56 = vset.pattern.permute.xlu0 0
    %57 = vperm.xlu0 %56, %v53
    %v58 = vpop.permute.xlu0 %57
    %61 = vset.pattern.permute.xlu0 0
    %62 = vperm.xlu0 %61, %v54
    %v63 = vpop.permute.xlu0 %62
    %v65 = vld [vmem:[%s0] sm:$0xff]
    %v66 = vld [vmem:[%s0 + $0x8] sm:$0xff]
    %v67 = vmul.f32 %v65, 80.0
    %v68 = vmul.f32 %v66, 80.0
    %v69 = vld [vmem:[%s3] sm:$0xff]
    %v70 = vld [vmem:[%s3 + $0x8] sm:$0xff]
    %v71 = vld [vmem:[%s3 + $0x10] sm:$0xff]
    %v72 = vld [vmem:[%s3 + $0x18] sm:$0xff]
    %v73 = vld [vmem:[%s3 + $0x20] sm:$0xff]
    %v74 = vld [vmem:[%s3 + $0x28] sm:$0xff]
    %v75 = vld [vmem:[%s3 + $0x30] sm:$0xff]
    %v76 = vld [vmem:[%s3 + $0x38] sm:$0xff]
    %v77 = vmul.f32 %v67, 0.012499756
    %v78 = vmul.f32 %v68, 0.012499756
    %v79 = vpack.c.bf16 %v78, %v77
    %v88 = vunpack.c.l.b16 %v36
    %v89 = vunpack.c.l.b16 %v37
    %v90 = vunpack.c.l.b16 %v38
    %v91 = vunpack.c.l.b16 %v39
    %v92 = vunpack.c.l.b16 %v40
    %v93 = vunpack.c.l.b16 %v41
    %v94 = vunpack.c.l.b16 %v42
    %v95 = vunpack.c.l.b16 %v43
    %v96 = vpack.c.b16 %v89, %v88
    %v97 = vpack.c.b16 %v91, %v90
    %v98 = vpack.c.b16 %v93, %v92
    %v99 = vpack.c.b16 %v95, %v94
    %vm100 = vcmask 130048
    %v102 = vsel %vm100, %v96, 0
    %v105 = vsel %vm100, %v97, 0
    %v108 = vsel %vm100, %v98, 0
    %v111 = vsel %vm100, %v99, 0
    %113 = vmatprep.subr.bf16.mxu0 0
    %114 = vmatpush1.bf16.msra.mxu0 %v79
    %115 = vmatprep.subr.bf16.mxu0 0
    %116 = vmatpush1.bf16.msra.mxu0 0
    %117 = vmatprep.subr.bf16.mxu0 0
    %118 = vmatpush1.bf16.msra.mxu0 0
    %119 = vmatprep.subr.bf16.mxu0 0
    %120 = vmatpush1.bf16.msra.mxu0 0
    %121 = vmatprep.subr.bf16.mxu0 0
    %122 = vmatpush1.bf16.msra.mxu0 0
    %123 = vmatprep.subr.bf16.mxu0 0
    %124 = vmatpush1.bf16.msra.mxu0 0
    %125 = vmatprep.subr.bf16.mxu0 0
    %126 = vmatpush1.bf16.msra.mxu0 0
    %127 = vmatprep.subr.bf16.mxu0 0
    %128 = vmatpush1.bf16.msra.mxu0 0
    %129 = vmatprep.subr.bf16.mxu0 0
    %130 = vmatpush1.bf16.msra.mxu0 0
    %131 = vmatprep.subr.bf16.mxu0 0
    %132 = vmatpush1.bf16.msra.mxu0 0
    %133 = vmatprep.subr.bf16.mxu0 0
    %134 = vmatpush1.bf16.msra.mxu0 0
    %135 = vmatprep.subr.bf16.mxu0 0
    %136 = vmatpush1.bf16.msra.mxu0 0
    %137 = vmatprep.subr.bf16.mxu0 0
    %138 = vmatpush1.bf16.msra.mxu0 0
    %139 = vmatprep.subr.bf16.mxu0 0
    %140 = vmatpush1.bf16.msra.mxu0 0
    %141 = vmatprep.subr.bf16.mxu0 0
    %142 = vmatpush1.bf16.msra.mxu0 0
    %143 = vmatprep.subr.bf16.mxu0 0
    %144 = vmatpush1.bf16.msra.mxu0 0
    %145 = vmatprep.mubr.bf16.mxu0 0
    %146 = vmatmul.mubr.bf16.gmra.mrb[0].mxu0 %v102
    %v147 = vpop.f32.mrb[0].mxu0
    %v148 = vadd.f32 %v28, %v147
    %v149 = vpop.f32.mrb[0].mxu0
    %v150 = vpop.f32.mrb[0].mxu0
    %v151 = vadd.f32 %v29, %v150
    %v152 = vpop.f32.mrb[0].mxu0
    %153 = vmatprep.mubr.bf16.mxu0 0
    %154 = vmatmul.mubr.bf16.gmra.mrb[0].mxu0 %v105
    %v155 = vpop.f32.mrb[0].mxu0
    %v156 = vadd.f32 %v30, %v155
    %v157 = vpop.f32.mrb[0].mxu0
    %v158 = vpop.f32.mrb[0].mxu0
    %v159 = vadd.f32 %v31, %v158
    %v160 = vpop.f32.mrb[0].mxu0
    %161 = vmatprep.mubr.bf16.mxu0 0
    %162 = vmatmul.mubr.bf16.gmra.mrb[0].mxu0 %v108
    %v163 = vpop.f32.mrb[0].mxu0
    %v164 = vadd.f32 %v32, %v163
    %v165 = vpop.f32.mrb[0].mxu0
    %v166 = vpop.f32.mrb[0].mxu0
    %v167 = vadd.f32 %v33, %v166
    %v168 = vpop.f32.mrb[0].mxu0
    %169 = vmatprep.mubr.bf16.mxu0 0
    %170 = vmatmul.mubr.bf16.gmra.mrb[0].mxu0 %v111
    %v171 = vpop.f32.mrb[0].mxu0
    %v172 = vadd.f32 %v34, %v171
    %v173 = vpop.f32.mrb[0].mxu0
    %v174 = vpop.f32.mrb[0].mxu0
    %v175 = vadd.f32 %v35, %v174
    %v176 = vpop.f32.mrb[0].mxu0
    %177 = vdwg.mxu0
    %179 = vset.pattern.permute.xlu0 0
    %180 = vperm.xlu0 %179, %v69
    %v181 = vpop.permute.xlu0 %180
    %184 = vset.pattern.permute.xlu0 0
    %185 = vperm.xlu0 %184, %v70
    %v186 = vpop.permute.xlu0 %185
    %189 = vset.pattern.permute.xlu0 0
    %190 = vperm.xlu0 %189, %v71
    %v191 = vpop.permute.xlu0 %190
    %194 = vset.pattern.permute.xlu0 0
    %195 = vperm.xlu0 %194, %v72
    %v196 = vpop.permute.xlu0 %195
    %199 = vset.pattern.permute.xlu0 0
    %200 = vperm.xlu0 %199, %v73
    %v201 = vpop.permute.xlu0 %200
    %204 = vset.pattern.permute.xlu0 0
    %205 = vperm.xlu0 %204, %v74
    %v206 = vpop.permute.xlu0 %205
    %209 = vset.pattern.permute.xlu0 0
    %210 = vperm.xlu0 %209, %v75
    %v211 = vpop.permute.xlu0 %210
    %214 = vset.pattern.permute.xlu0 0
    %215 = vperm.xlu0 %214, %v76
    %v216 = vpop.permute.xlu0 %215
    %v218 = vadd.f32 %v148, %v181
    %v219 = vadd.f32 %v151, %v186
    %v220 = vadd.f32 %v156, %v191
    %v221 = vadd.f32 %v159, %v196
    %v222 = vadd.f32 %v164, %v201
    %v223 = vadd.f32 %v167, %v206
    %v224 = vadd.f32 %v172, %v211
    %v225 = vadd.f32 %v175, %v216
    %v226 = vmin.f32 %v218, 20.0
    %v227 = vmin.f32 %v219, 20.0
    %v228 = vmin.f32 %v220, 20.0
    %v229 = vmin.f32 %v221, 20.0
    %v230 = vmin.f32 %v222, 20.0
    %v231 = vmin.f32 %v223, 20.0
    %v232 = vmin.f32 %v224, 20.0
    %v233 = vmin.f32 %v225, 20.0
    %v234 = vmul.f32 %v226, 1.442695
    %v235 = vpow.pop %v234
    %v236 = vmul.f32 %v227, 1.442695
    %v237 = vpow.pop %v236
    %v238 = vmul.f32 %v228, 1.442695
    %v239 = vpow.pop %v238
    %v240 = vmul.f32 %v229, 1.442695
    %v241 = vpow.pop %v240
    %v242 = vmul.f32 %v230, 1.442695
    %v243 = vpow.pop %v242
    %v244 = vmul.f32 %v231, 1.442695
    %v245 = vpow.pop %v244
    %v246 = vmul.f32 %v232, 1.442695
    %v247 = vpow.pop %v246
    %v248 = vmul.f32 %v233, 1.442695
    %v249 = vpow.pop %v248
    %v250 = vadd.f32 %v235, 2.0
    %v251 = vadd.f32 %v237, 2.0
    %v252 = vadd.f32 %v239, 2.0
    %v253 = vadd.f32 %v241, 2.0
    %v254 = vadd.f32 %v243, 2.0
    %v255 = vadd.f32 %v245, 2.0
    %v256 = vadd.f32 %v247, 2.0
    %v257 = vadd.f32 %v249, 2.0
    %v258 = vmul.f32 %v235, %v250
    %v259 = vmul.f32 %v237, %v251
    %v260 = vmul.f32 %v239, %v252
    %v261 = vmul.f32 %v241, %v253
    %v262 = vmul.f32 %v243, %v254
    %v263 = vmul.f32 %v245, %v255
    %v264 = vmul.f32 %v247, %v256
    %v265 = vmul.f32 %v249, %v257
    %v266 = vmul.f32 %v218, %v258
    %v267 = vmul.f32 %v219, %v259
    %v268 = vmul.f32 %v220, %v260
    %v269 = vmul.f32 %v221, %v261
    %v270 = vmul.f32 %v222, %v262
    %v271 = vmul.f32 %v223, %v263
    %v272 = vmul.f32 %v224, %v264
    %v273 = vmul.f32 %v225, %v265
    %v274 = vadd.f32 %v258, 2.0
    %v275 = vadd.f32 %v259, 2.0
    %v276 = vadd.f32 %v260, 2.0
    %v277 = vadd.f32 %v261, 2.0
    %v278 = vadd.f32 %v262, 2.0
    %v279 = vadd.f32 %v263, 2.0
    %v280 = vadd.f32 %v264, 2.0
    %v281 = vadd.f32 %v265, 2.0
    %v282 = vrcp.pop %v274
    %v283 = vrcp.pop %v275
    %v284 = vrcp.pop %v276
    %v285 = vrcp.pop %v277
    %v286 = vrcp.pop %v278
    %v287 = vrcp.pop %v279
    %v288 = vrcp.pop %v280
    %v289 = vrcp.pop %v281
    %v290 = vmul.f32 %v266, %v282
    %v291 = vmul.f32 %v267, %v283
    %v292 = vmul.f32 %v268, %v284
    %v293 = vmul.f32 %v269, %v285
    %v294 = vmul.f32 %v270, %v286
    %v295 = vmul.f32 %v271, %v287
    %v296 = vmul.f32 %v272, %v288
    %v297 = vmul.f32 %v273, %v289
    %v298 = vpack.c.bf16 %v291, %v290
    %v299 = vpack.c.bf16 %v293, %v292
    %v300 = vpack.c.bf16 %v295, %v294
    %v301 = vpack.c.bf16 %v297, %v296
    %v304 = vunpack.c.l.b16 %v44
    %v305 = vunpack.c.l.b16 %v45
    %v306 = vpack.c.b16 %v305, %v304
    %vm307 = vcmask 523264
    %v309 = vsel %vm307, %v306, 0
    %311 = vmatprep.subr.bf16.mxu0 0
    %312 = vmatpush1.bf16.msra.mxu0 %v298
    %313 = vmatprep.subr.bf16.mxu0 0
    %314 = vmatpush1.bf16.msra.mxu0 %v299
    %315 = vmatprep.subr.bf16.mxu0 0
    %316 = vmatpush1.bf16.msra.mxu0 %v300
    %317 = vmatprep.subr.bf16.mxu0 0
    %318 = vmatpush1.bf16.msra.mxu0 %v301
    %319 = vmatprep.subr.bf16.mxu0 0
    %320 = vmatpush1.bf16.msra.mxu0 0
    %321 = vmatprep.subr.bf16.mxu0 0
    %322 = vmatpush1.bf16.msra.mxu0 0
    %323 = vmatprep.subr.bf16.mxu0 0
    %324 = vmatpush1.bf16.msra.mxu0 0
    %325 = vmatprep.subr.bf16.mxu0 0
    %326 = vmatpush1.bf16.msra.mxu0 0
    %327 = vmatprep.subr.bf16.mxu0 0
    %328 = vmatpush1.bf16.msra.mxu0 0
    %329 = vmatprep.subr.bf16.mxu0 0
    %330 = vmatpush1.bf16.msra.mxu0 0
    %331 = vmatprep.subr.bf16.mxu0 0
    %332 = vmatpush1.bf16.msra.mxu0 0
    %333 = vmatprep.subr.bf16.mxu0 0
    %334 = vmatpush1.bf16.msra.mxu0 0
    %335 = vmatprep.subr.bf16.mxu0 0
    %336 = vmatpush1.bf16.msra.mxu0 0
    %337 = vmatprep.subr.bf16.mxu0 0
    %338 = vmatpush1.bf16.msra.mxu0 0
    %339 = vmatprep.subr.bf16.mxu0 0
    %340 = vmatpush1.bf16.msra.mxu0 0
    %341 = vmatprep.subr.bf16.mxu0 0
    %342 = vmatpush1.bf16.msra.mxu0 0
    %343 = vmatprep.mubr.bf16.mxu0 0
    %344 = vmatmul.mubr.bf16.gmra.mrb[0].mxu0 %v309
    %v345 = vpop.f32.mrb[0].mxu0
    %v346 = vadd.f32 %v58, %v345
    %v347 = vpop.f32.mrb[0].mxu0
    %v348 = vpop.f32.mrb[0].mxu0
    %v349 = vadd.f32 %v63, %v348
    %v350 = vpop.f32.mrb[0].mxu0
    %351 = vdwg.mxu0
    %v352 = vmul.f32 %v346, %v51
    %v353 = vmul.f32 %v349, %v51
    %v354 = vmul.f32 %v67, 3.9060975e-05
    %v355 = vmul.f32 %v68, 3.9060975e-05
    %v356 = vmul.f32 %v352, 0.49999022
    %v357 = vmul.f32 %v353, 0.49999022
    %v358 = vadd.f32 %v354, %v356
    %v359 = vadd.f32 %v355, %v357
    %v360 = vsub.f32 %v67, %v358
    %v361 = vsub.f32 %v68, %v359
    %v362 = vmul.f32 %v360, 0.0125
    %v363 = vmul.f32 %v361, 0.0125
    %v364 = vmul.f32 %v362, -70.2768
    %v365 = vmul.f32 %v363, -70.2768
    %v366 = vadd.f32 %v67, %v364
    %v367 = vadd.f32 %v68, %v365
    %v368 = vmul.f32 %v366, 0.102711074
    %v369 = vmul.f32 %v367, 0.102711074
    %v370 = vpack.c.bf16 %v369, %v368
    %371 = vmatprep.subr.bf16.mxu0 0
    %372 = vmatpush1.bf16.msra.mxu0 %v370
    %373 = vmatprep.subr.bf16.mxu0 0
    %374 = vmatpush1.bf16.msra.mxu0 0
    %375 = vmatprep.subr.bf16.mxu0 0
    %376 = vmatpush1.bf16.msra.mxu0 0
    %377 = vmatprep.subr.bf16.mxu0 0
    %378 = vmatpush1.bf16.msra.mxu0 0
    %379 = vmatprep.subr.bf16.mxu0 0
    %380 = vmatpush1.bf16.msra.mxu0 0
    %381 = vmatprep.subr.bf16.mxu0 0
    %382 = vmatpush1.bf16.msra.mxu0 0
    %383 = vmatprep.subr.bf16.mxu0 0
    %384 = vmatpush1.bf16.msra.mxu0 0
    %385 = vmatprep.subr.bf16.mxu0 0
    %386 = vmatpush1.bf16.msra.mxu0 0
    %387 = vmatprep.subr.bf16.mxu0 0
    %388 = vmatpush1.bf16.msra.mxu0 0
    %389 = vmatprep.subr.bf16.mxu0 0
    %390 = vmatpush1.bf16.msra.mxu0 0
    %391 = vmatprep.subr.bf16.mxu0 0
    %392 = vmatpush1.bf16.msra.mxu0 0
    %393 = vmatprep.subr.bf16.mxu0 0
    %394 = vmatpush1.bf16.msra.mxu0 0
    %395 = vmatprep.subr.bf16.mxu0 0
    %396 = vmatpush1.bf16.msra.mxu0 0
    %397 = vmatprep.subr.bf16.mxu0 0
    %398 = vmatpush1.bf16.msra.mxu0 0
    %399 = vmatprep.subr.bf16.mxu0 0
    %400 = vmatpush1.bf16.msra.mxu0 0
    %401 = vmatprep.subr.bf16.mxu0 0
    %402 = vmatpush1.bf16.msra.mxu0 0
    %403 = vmatprep.mubr.bf16.mxu0 0
    %404 = vmatmul.mubr.bf16.gmra.mrb[0].mxu0 %v102
    %v405 = vpop.f32.mrb[0].mxu0
    %v406 = vadd.f32 %v28, %v405
    %v407 = vpop.f32.mrb[0].mxu0
    %v408 = vpop.f32.mrb[0].mxu0
    %v409 = vadd.f32 %v29, %v408
    %v410 = vpop.f32.mrb[0].mxu0
    %411 = vmatprep.mubr.bf16.mxu0 0
    %412 = vmatmul.mubr.bf16.gmra.mrb[0].mxu0 %v105
    %v413 = vpop.f32.mrb[0].mxu0
    %v414 = vadd.f32 %v30, %v413
    %v415 = vpop.f32.mrb[0].mxu0
    %v416 = vpop.f32.mrb[0].mxu0
    %v417 = vadd.f32 %v31, %v416
    %v418 = vpop.f32.mrb[0].mxu0
    %419 = vmatprep.mubr.bf16.mxu0 0
    %420 = vmatmul.mubr.bf16.gmra.mrb[0].mxu0 %v108
    %v421 = vpop.f32.mrb[0].mxu0
    %v422 = vadd.f32 %v32, %v421
    %v423 = vpop.f32.mrb[0].mxu0
    %v424 = vpop.f32.mrb[0].mxu0
    %v425 = vadd.f32 %v33, %v424
    %v426 = vpop.f32.mrb[0].mxu0
    %427 = vmatprep.mubr.bf16.mxu0 0
    %428 = vmatmul.mubr.bf16.gmra.mrb[0].mxu0 %v111
    %v429 = vpop.f32.mrb[0].mxu0
    %v430 = vadd.f32 %v34, %v429
    %v431 = vpop.f32.mrb[0].mxu0
    %v432 = vpop.f32.mrb[0].mxu0
    %v433 = vadd.f32 %v35, %v432
    %v434 = vpop.f32.mrb[0].mxu0
    %435 = vdwg.mxu0
    %436 = vset.pattern.permute.xlu0 1
    %437 = vperm.xlu0 %436, %v69
    %v438 = vpop.permute.xlu0 %437
    %440 = vset.pattern.permute.xlu0 1
    %441 = vperm.xlu0 %440, %v70
    %v442 = vpop.permute.xlu0 %441
    %444 = vset.pattern.permute.xlu0 1
    %445 = vperm.xlu0 %444, %v71
    %v446 = vpop.permute.xlu0 %445
    %448 = vset.pattern.permute.xlu0 1
    %449 = vperm.xlu0 %448, %v72
    %v450 = vpop.permute.xlu0 %449
    %452 = vset.pattern.permute.xlu0 1
    %453 = vperm.xlu0 %452, %v73
    %v454 = vpop.permute.xlu0 %453
    %456 = vset.pattern.permute.xlu0 1
    %457 = vperm.xlu0 %456, %v74
    %v458 = vpop.permute.xlu0 %457
    %460 = vset.pattern.permute.xlu0 1
    %461 = vperm.xlu0 %460, %v75
    %v462 = vpop.permute.xlu0 %461
    %464 = vset.pattern.permute.xlu0 1
    %465 = vperm.xlu0 %464, %v76
    %v466 = vpop.permute.xlu0 %465
    %v468 = vadd.f32 %v406, %v438
    %v469 = vadd.f32 %v409, %v442
    %v470 = vadd.f32 %v414, %v446
    %v471 = vadd.f32 %v417, %v450
    %v472 = vadd.f32 %v422, %v454
    %v473 = vadd.f32 %v425, %v458
    %v474 = vadd.f32 %v430, %v462
    %v475 = vadd.f32 %v433, %v466
    %v476 = vmin.f32 %v468, 20.0
    %v477 = vmin.f32 %v469, 20.0
    %v478 = vmin.f32 %v470, 20.0
    %v479 = vmin.f32 %v471, 20.0
    %v480 = vmin.f32 %v472, 20.0
    %v481 = vmin.f32 %v473, 20.0
    %v482 = vmin.f32 %v474, 20.0
    %v483 = vmin.f32 %v475, 20.0
    %v484 = vmul.f32 %v476, 1.442695
    %v485 = vpow.pop %v484
    %v486 = vmul.f32 %v477, 1.442695
    %v487 = vpow.pop %v486
    %v488 = vmul.f32 %v478, 1.442695
    %v489 = vpow.pop %v488
    %v490 = vmul.f32 %v479, 1.442695
    %v491 = vpow.pop %v490
    %v492 = vmul.f32 %v480, 1.442695
    %v493 = vpow.pop %v492
    %v494 = vmul.f32 %v481, 1.442695
    %v495 = vpow.pop %v494
    %v496 = vmul.f32 %v482, 1.442695
    %v497 = vpow.pop %v496
    %v498 = vmul.f32 %v483, 1.442695
    %v499 = vpow.pop %v498
    %v500 = vadd.f32 %v485, 2.0
    %v501 = vadd.f32 %v487, 2.0
    %v502 = vadd.f32 %v489, 2.0
    %v503 = vadd.f32 %v491, 2.0
    %v504 = vadd.f32 %v493, 2.0
    %v505 = vadd.f32 %v495, 2.0
    %v506 = vadd.f32 %v497, 2.0
    %v507 = vadd.f32 %v499, 2.0
    %v508 = vmul.f32 %v485, %v500
    %v509 = vmul.f32 %v487, %v501
    %v510 = vmul.f32 %v489, %v502
    %v511 = vmul.f32 %v491, %v503
    %v512 = vmul.f32 %v493, %v504
    %v513 = vmul.f32 %v495, %v505
    %v514 = vmul.f32 %v497, %v506
    %v515 = vmul.f32 %v499, %v507
    %v516 = vmul.f32 %v468, %v508
    %v517 = vmul.f32 %v469, %v509
    %v518 = vmul.f32 %v470, %v510
    %v519 = vmul.f32 %v471, %v511
    %v520 = vmul.f32 %v472, %v512
    %v521 = vmul.f32 %v473, %v513
    %v522 = vmul.f32 %v474, %v514
    %v523 = vmul.f32 %v475, %v515
    %v524 = vadd.f32 %v508, 2.0
    %v525 = vadd.f32 %v509, 2.0
    %v526 = vadd.f32 %v510, 2.0
    %v527 = vadd.f32 %v511, 2.0
    %v528 = vadd.f32 %v512, 2.0
    %v529 = vadd.f32 %v513, 2.0
    %v530 = vadd.f32 %v514, 2.0
    %v531 = vadd.f32 %v515, 2.0
    %v532 = vrcp.pop %v524
    %v533 = vrcp.pop %v525
    %v534 = vrcp.pop %v526
    %v535 = vrcp.pop %v527
    %v536 = vrcp.pop %v528
    %v537 = vrcp.pop %v529
    %v538 = vrcp.pop %v530
    %v539 = vrcp.pop %v531
    %v540 = vmul.f32 %v516, %v532
    %v541 = vmul.f32 %v517, %v533
    %v542 = vmul.f32 %v518, %v534
    %v543 = vmul.f32 %v519, %v535
    %v544 = vmul.f32 %v520, %v536
    %v545 = vmul.f32 %v521, %v537
    %v546 = vmul.f32 %v522, %v538
    %v547 = vmul.f32 %v523, %v539
    %v548 = vpack.c.bf16 %v541, %v540
    %v549 = vpack.c.bf16 %v543, %v542
    %v550 = vpack.c.bf16 %v545, %v544
    %v551 = vpack.c.bf16 %v547, %v546
    %552 = vmatprep.subr.bf16.mxu0 0
    %553 = vmatpush1.bf16.msra.mxu0 %v548
    %554 = vmatprep.subr.bf16.mxu0 0
    %555 = vmatpush1.bf16.msra.mxu0 %v549
    %556 = vmatprep.subr.bf16.mxu0 0
    %557 = vmatpush1.bf16.msra.mxu0 %v550
    %558 = vmatprep.subr.bf16.mxu0 0
    %559 = vmatpush1.bf16.msra.mxu0 %v551
    %560 = vmatprep.subr.bf16.mxu0 0
    %561 = vmatpush1.bf16.msra.mxu0 0
    %562 = vmatprep.subr.bf16.mxu0 0
    %563 = vmatpush1.bf16.msra.mxu0 0
    %564 = vmatprep.subr.bf16.mxu0 0
    %565 = vmatpush1.bf16.msra.mxu0 0
    %566 = vmatprep.subr.bf16.mxu0 0
    %567 = vmatpush1.bf16.msra.mxu0 0
    %568 = vmatprep.subr.bf16.mxu0 0
    %569 = vmatpush1.bf16.msra.mxu0 0
    %570 = vmatprep.subr.bf16.mxu0 0
    %571 = vmatpush1.bf16.msra.mxu0 0
    %572 = vmatprep.subr.bf16.mxu0 0
    %573 = vmatpush1.bf16.msra.mxu0 0
    %574 = vmatprep.subr.bf16.mxu0 0
    %575 = vmatpush1.bf16.msra.mxu0 0
    %576 = vmatprep.subr.bf16.mxu0 0
    %577 = vmatpush1.bf16.msra.mxu0 0
    %578 = vmatprep.subr.bf16.mxu0 0
    %579 = vmatpush1.bf16.msra.mxu0 0
    %580 = vmatprep.subr.bf16.mxu0 0
    %581 = vmatpush1.bf16.msra.mxu0 0
    %582 = vmatprep.subr.bf16.mxu0 0
    %583 = vmatpush1.bf16.msra.mxu0 0
    %584 = vmatprep.mubr.bf16.mxu0 0
    %585 = vmatmul.mubr.bf16.gmra.mrb[0].mxu0 %v309
    %v586 = vpop.f32.mrb[0].mxu0
    %v587 = vadd.f32 %v58, %v586
    %v588 = vpop.f32.mrb[0].mxu0
    %v589 = vpop.f32.mrb[0].mxu0
    %v590 = vadd.f32 %v63, %v589
    %v591 = vpop.f32.mrb[0].mxu0
    %592 = vdwg.mxu0
    %v593 = vmul.f32 %v587, %v51
    %v594 = vmul.f32 %v590, %v51
    %v595 = vmul.f32 %v366, 0.002637391
    %v596 = vmul.f32 %v367, 0.002637391
    %v597 = vmul.f32 %v593, 0.4993402
    %v598 = vmul.f32 %v594, 0.4993402
    %v599 = vadd.f32 %v595, %v597
    %v600 = vadd.f32 %v596, %v598
    %v601 = vsub.f32 %v366, %v599
    %v602 = vsub.f32 %v367, %v600
    %v603 = vmul.f32 %v601, 0.10284679
    %v604 = vmul.f32 %v602, 0.10284679
    %v605 = vmul.f32 %v362, 0.5
    %v606 = vmul.f32 %v363, 0.5
    %v607 = vmul.f32 %v603, 0.5
    %v608 = vmul.f32 %v604, 0.5
    %v609 = vadd.f32 %v605, %v607
    %v610 = vadd.f32 %v606, %v608
    %v611 = vmul.f32 %v609, -70.2768
    %v612 = vmul.f32 %v610, -70.2768
    %v613 = vadd.f32 %v67, %v611
    %v614 = vadd.f32 %v68, %v612
    %v615 = vmul.f32 %v613, 0.102711074
    %v616 = vmul.f32 %v614, 0.102711074
    %v617 = vpack.c.bf16 %v616, %v615
    %618 = vmatprep.subr.bf16.mxu0 0
    %619 = vmatpush1.bf16.msra.mxu0 %v617
    %620 = vmatprep.subr.bf16.mxu0 0
    %621 = vmatpush1.bf16.msra.mxu0 0
    %622 = vmatprep.subr.bf16.mxu0 0
    %623 = vmatpush1.bf16.msra.mxu0 0
    %624 = vmatprep.subr.bf16.mxu0 0
    %625 = vmatpush1.bf16.msra.mxu0 0
    %626 = vmatprep.subr.bf16.mxu0 0
    %627 = vmatpush1.bf16.msra.mxu0 0
    %628 = vmatprep.subr.bf16.mxu0 0
    %629 = vmatpush1.bf16.msra.mxu0 0
    %630 = vmatprep.subr.bf16.mxu0 0
    %631 = vmatpush1.bf16.msra.mxu0 0
    %632 = vmatprep.subr.bf16.mxu0 0
    %633 = vmatpush1.bf16.msra.mxu0 0
    %634 = vmatprep.subr.bf16.mxu0 0
    %635 = vmatpush1.bf16.msra.mxu0 0
    %636 = vmatprep.subr.bf16.mxu0 0
    %637 = vmatpush1.bf16.msra.mxu0 0
    %638 = vmatprep.subr.bf16.mxu0 0
    %639 = vmatpush1.bf16.msra.mxu0 0
    %640 = vmatprep.subr.bf16.mxu0 0
    %641 = vmatpush1.bf16.msra.mxu0 0
    %642 = vmatprep.subr.bf16.mxu0 0
    %643 = vmatpush1.bf16.msra.mxu0 0
    %644 = vmatprep.subr.bf16.mxu0 0
    %645 = vmatpush1.bf16.msra.mxu0 0
    %646 = vmatprep.subr.bf16.mxu0 0
    %647 = vmatpush1.bf16.msra.mxu0 0
    %648 = vmatprep.subr.bf16.mxu0 0
    %649 = vmatpush1.bf16.msra.mxu0 0
    %650 = vmatprep.mubr.bf16.mxu0 0
    %651 = vmatmul.mubr.bf16.gmra.mrb[0].mxu0 %v102
    %v652 = vpop.f32.mrb[0].mxu0
    %v653 = vadd.f32 %v28, %v652
    %v654 = vpop.f32.mrb[0].mxu0
    %v655 = vpop.f32.mrb[0].mxu0
    %v656 = vadd.f32 %v29, %v655
    %v657 = vpop.f32.mrb[0].mxu0
    %658 = vmatprep.mubr.bf16.mxu0 0
    %659 = vmatmul.mubr.bf16.gmra.mrb[0].mxu0 %v105
    %v660 = vpop.f32.mrb[0].mxu0
    %v661 = vadd.f32 %v30, %v660
    %v662 = vpop.f32.mrb[0].mxu0
    %v663 = vpop.f32.mrb[0].mxu0
    %v664 = vadd.f32 %v31, %v663
    %v665 = vpop.f32.mrb[0].mxu0
    %666 = vmatprep.mubr.bf16.mxu0 0
    %667 = vmatmul.mubr.bf16.gmra.mrb[0].mxu0 %v108
    %v668 = vpop.f32.mrb[0].mxu0
    %v669 = vadd.f32 %v32, %v668
    %v670 = vpop.f32.mrb[0].mxu0
    %v671 = vpop.f32.mrb[0].mxu0
    %v672 = vadd.f32 %v33, %v671
    %v673 = vpop.f32.mrb[0].mxu0
    %674 = vmatprep.mubr.bf16.mxu0 0
    %675 = vmatmul.mubr.bf16.gmra.mrb[0].mxu0 %v111
    %v676 = vpop.f32.mrb[0].mxu0
    %v677 = vadd.f32 %v34, %v676
    %v678 = vpop.f32.mrb[0].mxu0
    %v679 = vpop.f32.mrb[0].mxu0
    %v680 = vadd.f32 %v35, %v679
    %v681 = vpop.f32.mrb[0].mxu0
    %682 = vdwg.mxu0
    %683 = vset.pattern.permute.xlu0 2
    %684 = vperm.xlu0 %683, %v69
    %v685 = vpop.permute.xlu0 %684
    %687 = vset.pattern.permute.xlu0 2
    %688 = vperm.xlu0 %687, %v70
    %v689 = vpop.permute.xlu0 %688
    %691 = vset.pattern.permute.xlu0 2
    %692 = vperm.xlu0 %691, %v71
    %v693 = vpop.permute.xlu0 %692
    %695 = vset.pattern.permute.xlu0 2
    %696 = vperm.xlu0 %695, %v72
    %v697 = vpop.permute.xlu0 %696
    %699 = vset.pattern.permute.xlu0 2
    %700 = vperm.xlu0 %699, %v73
    %v701 = vpop.permute.xlu0 %700
    %703 = vset.pattern.permute.xlu0 2
    %704 = vperm.xlu0 %703, %v74
    %v705 = vpop.permute.xlu0 %704
    %707 = vset.pattern.permute.xlu0 2
    %708 = vperm.xlu0 %707, %v75
    %v709 = vpop.permute.xlu0 %708
    %711 = vset.pattern.permute.xlu0 2
    %712 = vperm.xlu0 %711, %v76
    %v713 = vpop.permute.xlu0 %712
    %v715 = vadd.f32 %v653, %v685
    %v716 = vadd.f32 %v656, %v689
    %v717 = vadd.f32 %v661, %v693
    %v718 = vadd.f32 %v664, %v697
    %v719 = vadd.f32 %v669, %v701
    %v720 = vadd.f32 %v672, %v705
    %v721 = vadd.f32 %v677, %v709
    %v722 = vadd.f32 %v680, %v713
    %v723 = vmin.f32 %v715, 20.0
    %v724 = vmin.f32 %v716, 20.0
    %v725 = vmin.f32 %v717, 20.0
    %v726 = vmin.f32 %v718, 20.0
    %v727 = vmin.f32 %v719, 20.0
    %v728 = vmin.f32 %v720, 20.0
    %v729 = vmin.f32 %v721, 20.0
    %v730 = vmin.f32 %v722, 20.0
    %v731 = vmul.f32 %v723, 1.442695
    %v732 = vpow.pop %v731
    %v733 = vmul.f32 %v724, 1.442695
    %v734 = vpow.pop %v733
    %v735 = vmul.f32 %v725, 1.442695
    %v736 = vpow.pop %v735
    %v737 = vmul.f32 %v726, 1.442695
    %v738 = vpow.pop %v737
    %v739 = vmul.f32 %v727, 1.442695
    %v740 = vpow.pop %v739
    %v741 = vmul.f32 %v728, 1.442695
    %v742 = vpow.pop %v741
    %v743 = vmul.f32 %v729, 1.442695
    %v744 = vpow.pop %v743
    %v745 = vmul.f32 %v730, 1.442695
    %v746 = vpow.pop %v745
    %v747 = vadd.f32 %v732, 2.0
    %v748 = vadd.f32 %v734, 2.0
    %v749 = vadd.f32 %v736, 2.0
    %v750 = vadd.f32 %v738, 2.0
    %v751 = vadd.f32 %v740, 2.0
    %v752 = vadd.f32 %v742, 2.0
    %v753 = vadd.f32 %v744, 2.0
    %v754 = vadd.f32 %v746, 2.0
    %v755 = vmul.f32 %v732, %v747
    %v756 = vmul.f32 %v734, %v748
    %v757 = vmul.f32 %v736, %v749
    %v758 = vmul.f32 %v738, %v750
    %v759 = vmul.f32 %v740, %v751
    %v760 = vmul.f32 %v742, %v752
    %v761 = vmul.f32 %v744, %v753
    %v762 = vmul.f32 %v746, %v754
    %v763 = vmul.f32 %v715, %v755
    %v764 = vmul.f32 %v716, %v756
    %v765 = vmul.f32 %v717, %v757
    %v766 = vmul.f32 %v718, %v758
    %v767 = vmul.f32 %v719, %v759
    %v768 = vmul.f32 %v720, %v760
    %v769 = vmul.f32 %v721, %v761
    %v770 = vmul.f32 %v722, %v762
    %v771 = vadd.f32 %v755, 2.0
    %v772 = vadd.f32 %v756, 2.0
    %v773 = vadd.f32 %v757, 2.0
    %v774 = vadd.f32 %v758, 2.0
    %v775 = vadd.f32 %v759, 2.0
    %v776 = vadd.f32 %v760, 2.0
    %v777 = vadd.f32 %v761, 2.0
    %v778 = vadd.f32 %v762, 2.0
    %v779 = vrcp.pop %v771
    %v780 = vrcp.pop %v772
    %v781 = vrcp.pop %v773
    %v782 = vrcp.pop %v774
    %v783 = vrcp.pop %v775
    %v784 = vrcp.pop %v776
    %v785 = vrcp.pop %v777
    %v786 = vrcp.pop %v778
    %v787 = vmul.f32 %v763, %v779
    %v788 = vmul.f32 %v764, %v780
    %v789 = vmul.f32 %v765, %v781
    %v790 = vmul.f32 %v766, %v782
    %v791 = vmul.f32 %v767, %v783
    %v792 = vmul.f32 %v768, %v784
    %v793 = vmul.f32 %v769, %v785
    %v794 = vmul.f32 %v770, %v786
    %v795 = vpack.c.bf16 %v788, %v787
    %v796 = vpack.c.bf16 %v790, %v789
    %v797 = vpack.c.bf16 %v792, %v791
    %v798 = vpack.c.bf16 %v794, %v793
    %799 = vmatprep.subr.bf16.mxu0 0
    %800 = vmatpush1.bf16.msra.mxu0 %v795
    %801 = vmatprep.subr.bf16.mxu0 0
    %802 = vmatpush1.bf16.msra.mxu0 %v796
    %803 = vmatprep.subr.bf16.mxu0 0
    %804 = vmatpush1.bf16.msra.mxu0 %v797
    %805 = vmatprep.subr.bf16.mxu0 0
    %806 = vmatpush1.bf16.msra.mxu0 %v798
    %807 = vmatprep.subr.bf16.mxu0 0
    %808 = vmatpush1.bf16.msra.mxu0 0
    %809 = vmatprep.subr.bf16.mxu0 0
    %810 = vmatpush1.bf16.msra.mxu0 0
    %811 = vmatprep.subr.bf16.mxu0 0
    %812 = vmatpush1.bf16.msra.mxu0 0
    %813 = vmatprep.subr.bf16.mxu0 0
    %814 = vmatpush1.bf16.msra.mxu0 0
    %815 = vmatprep.subr.bf16.mxu0 0
    %816 = vmatpush1.bf16.msra.mxu0 0
    %817 = vmatprep.subr.bf16.mxu0 0
    %818 = vmatpush1.bf16.msra.mxu0 0
    %819 = vmatprep.subr.bf16.mxu0 0
    %820 = vmatpush1.bf16.msra.mxu0 0
    %821 = vmatprep.subr.bf16.mxu0 0
    %822 = vmatpush1.bf16.msra.mxu0 0
    %823 = vmatprep.subr.bf16.mxu0 0
    %824 = vmatpush1.bf16.msra.mxu0 0
    %825 = vmatprep.subr.bf16.mxu0 0
    %826 = vmatpush1.bf16.msra.mxu0 0
    %827 = vmatprep.subr.bf16.mxu0 0
    %828 = vmatpush1.bf16.msra.mxu0 0
    %829 = vmatprep.subr.bf16.mxu0 0
    %830 = vmatpush1.bf16.msra.mxu0 0
    %831 = vmatprep.mubr.bf16.mxu0 0
    %832 = vmatmul.mubr.bf16.gmra.mrb[0].mxu0 %v309
    %v833 = vpop.f32.mrb[0].mxu0
    %v834 = vadd.f32 %v58, %v833
    %v835 = vpop.f32.mrb[0].mxu0
    %v836 = vpop.f32.mrb[0].mxu0
    %v837 = vadd.f32 %v63, %v836
    %v838 = vpop.f32.mrb[0].mxu0
    %839 = vdwg.mxu0
    %v840 = vmul.f32 %v834, %v51
    %v841 = vmul.f32 %v837, %v51
    %v842 = vmul.f32 %v613, 0.002637391
    %v843 = vmul.f32 %v614, 0.002637391
    %v844 = vmul.f32 %v840, 0.4993402
    %v845 = vmul.f32 %v841, 0.4993402
    %v846 = vadd.f32 %v842, %v844
    %v847 = vadd.f32 %v843, %v845
    %v848 = vsub.f32 %v613, %v846
    %v849 = vsub.f32 %v614, %v847
    %v850 = vmul.f32 %v848, 0.10284679
    %v851 = vmul.f32 %v849, 0.10284679
    %v852 = vmul.f32 %v850, -9.253222
    %v853 = vmul.f32 %v851, -9.253222
    %v854 = vadd.f32 %v613, %v852
    %v855 = vadd.f32 %v614, %v853
    %v856 = vmul.f32 %v854, 1.4572858
    %v857 = vmul.f32 %v855, 1.4572858
    %v858 = vpack.c.bf16 %v857, %v856
    %859 = vmatprep.subr.bf16.mxu0 0
    %860 = vmatpush1.bf16.msra.mxu0 %v858
    %861 = vmatprep.subr.bf16.mxu0 0
    %862 = vmatpush1.bf16.msra.mxu0 0
    %863 = vmatprep.subr.bf16.mxu0 0
    %864 = vmatpush1.bf16.msra.mxu0 0
    %865 = vmatprep.subr.bf16.mxu0 0
    %866 = vmatpush1.bf16.msra.mxu0 0
    %867 = vmatprep.subr.bf16.mxu0 0
    %868 = vmatpush1.bf16.msra.mxu0 0
    %869 = vmatprep.subr.bf16.mxu0 0
    %870 = vmatpush1.bf16.msra.mxu0 0
    %871 = vmatprep.subr.bf16.mxu0 0
    %872 = vmatpush1.bf16.msra.mxu0 0
    %873 = vmatprep.subr.bf16.mxu0 0
    %874 = vmatpush1.bf16.msra.mxu0 0
    %875 = vmatprep.subr.bf16.mxu0 0
    %876 = vmatpush1.bf16.msra.mxu0 0
    %877 = vmatprep.subr.bf16.mxu0 0
    %878 = vmatpush1.bf16.msra.mxu0 0
    %879 = vmatprep.subr.bf16.mxu0 0
    %880 = vmatpush1.bf16.msra.mxu0 0
    %881 = vmatprep.subr.bf16.mxu0 0
    %882 = vmatpush1.bf16.msra.mxu0 0
    %883 = vmatprep.subr.bf16.mxu0 0
    %884 = vmatpush1.bf16.msra.mxu0 0
    %885 = vmatprep.subr.bf16.mxu0 0
    %886 = vmatpush1.bf16.msra.mxu0 0
    %887 = vmatprep.subr.bf16.mxu0 0
    %888 = vmatpush1.bf16.msra.mxu0 0
    %889 = vmatprep.subr.bf16.mxu0 0
    %890 = vmatpush1.bf16.msra.mxu0 0
    %891 = vmatprep.mubr.bf16.mxu0 0
    %892 = vmatmul.mubr.bf16.gmra.mrb[0].mxu0 %v102
    %v893 = vpop.f32.mrb[0].mxu0
    %v894 = vadd.f32 %v28, %v893
    %v895 = vpop.f32.mrb[0].mxu0
    %v896 = vpop.f32.mrb[0].mxu0
    %v897 = vadd.f32 %v29, %v896
    %v898 = vpop.f32.mrb[0].mxu0
    %899 = vmatprep.mubr.bf16.mxu0 0
    %900 = vmatmul.mubr.bf16.gmra.mrb[0].mxu0 %v105
    %v901 = vpop.f32.mrb[0].mxu0
    %v902 = vadd.f32 %v30, %v901
    %v903 = vpop.f32.mrb[0].mxu0
    %v904 = vpop.f32.mrb[0].mxu0
    %v905 = vadd.f32 %v31, %v904
    %v906 = vpop.f32.mrb[0].mxu0
    %907 = vmatprep.mubr.bf16.mxu0 0
    %908 = vmatmul.mubr.bf16.gmra.mrb[0].mxu0 %v108
    %v909 = vpop.f32.mrb[0].mxu0
    %v910 = vadd.f32 %v32, %v909
    %v911 = vpop.f32.mrb[0].mxu0
    %v912 = vpop.f32.mrb[0].mxu0
    %v913 = vadd.f32 %v33, %v912
    %v914 = vpop.f32.mrb[0].mxu0
    %915 = vmatprep.mubr.bf16.mxu0 0
    %916 = vmatmul.mubr.bf16.gmra.mrb[0].mxu0 %v111
    %v917 = vpop.f32.mrb[0].mxu0
    %v918 = vadd.f32 %v34, %v917
    %v919 = vpop.f32.mrb[0].mxu0
    %v920 = vpop.f32.mrb[0].mxu0
    %v921 = vadd.f32 %v35, %v920
    %v922 = vpop.f32.mrb[0].mxu0
    %923 = vdwg.mxu0
    %924 = vset.pattern.permute.xlu0 3
    %925 = vperm.xlu0 %924, %v69
    %v926 = vpop.permute.xlu0 %925
    %928 = vset.pattern.permute.xlu0 3
    %929 = vperm.xlu0 %928, %v70
    %v930 = vpop.permute.xlu0 %929
    %932 = vset.pattern.permute.xlu0 3
    %933 = vperm.xlu0 %932, %v71
    %v934 = vpop.permute.xlu0 %933
    %936 = vset.pattern.permute.xlu0 3
    %937 = vperm.xlu0 %936, %v72
    %v938 = vpop.permute.xlu0 %937
    %940 = vset.pattern.permute.xlu0 3
    %941 = vperm.xlu0 %940, %v73
    %v942 = vpop.permute.xlu0 %941
    %944 = vset.pattern.permute.xlu0 3
    %945 = vperm.xlu0 %944, %v74
    %v946 = vpop.permute.xlu0 %945
    %948 = vset.pattern.permute.xlu0 3
    %949 = vperm.xlu0 %948, %v75
    %v950 = vpop.permute.xlu0 %949
    %952 = vset.pattern.permute.xlu0 3
    %953 = vperm.xlu0 %952, %v76
    %v954 = vpop.permute.xlu0 %953
    %v956 = vadd.f32 %v894, %v926
    %v957 = vadd.f32 %v897, %v930
    %v958 = vadd.f32 %v902, %v934
    %v959 = vadd.f32 %v905, %v938
    %v960 = vadd.f32 %v910, %v942
    %v961 = vadd.f32 %v913, %v946
    %v962 = vadd.f32 %v918, %v950
    %v963 = vadd.f32 %v921, %v954
    %v964 = vmin.f32 %v956, 20.0
    %v965 = vmin.f32 %v957, 20.0
    %v966 = vmin.f32 %v958, 20.0
    %v967 = vmin.f32 %v959, 20.0
    %v968 = vmin.f32 %v960, 20.0
    %v969 = vmin.f32 %v961, 20.0
    %v970 = vmin.f32 %v962, 20.0
    %v971 = vmin.f32 %v963, 20.0
    %v972 = vmul.f32 %v964, 1.442695
    %v973 = vpow.pop %v972
    %v974 = vmul.f32 %v965, 1.442695
    %v975 = vpow.pop %v974
    %v976 = vmul.f32 %v966, 1.442695
    %v977 = vpow.pop %v976
    %v978 = vmul.f32 %v967, 1.442695
    %v979 = vpow.pop %v978
    %v980 = vmul.f32 %v968, 1.442695
    %v981 = vpow.pop %v980
    %v982 = vmul.f32 %v969, 1.442695
    %v983 = vpow.pop %v982
    %v984 = vmul.f32 %v970, 1.442695
    %v985 = vpow.pop %v984
    %v986 = vmul.f32 %v971, 1.442695
    %v987 = vpow.pop %v986
    %v988 = vadd.f32 %v973, 2.0
    %v989 = vadd.f32 %v975, 2.0
    %v990 = vadd.f32 %v977, 2.0
    %v991 = vadd.f32 %v979, 2.0
    %v992 = vadd.f32 %v981, 2.0
    %v993 = vadd.f32 %v983, 2.0
    %v994 = vadd.f32 %v985, 2.0
    %v995 = vadd.f32 %v987, 2.0
    %v996 = vmul.f32 %v973, %v988
    %v997 = vmul.f32 %v975, %v989
    %v998 = vmul.f32 %v977, %v990
    %v999 = vmul.f32 %v979, %v991
    %v1000 = vmul.f32 %v981, %v992
    %v1001 = vmul.f32 %v983, %v993
    %v1002 = vmul.f32 %v985, %v994
    %v1003 = vmul.f32 %v987, %v995
    %v1004 = vmul.f32 %v956, %v996
    %v1005 = vmul.f32 %v957, %v997
    %v1006 = vmul.f32 %v958, %v998
    %v1007 = vmul.f32 %v959, %v999
    %v1008 = vmul.f32 %v960, %v1000
    %v1009 = vmul.f32 %v961, %v1001
    %v1010 = vmul.f32 %v962, %v1002
    %v1011 = vmul.f32 %v963, %v1003
    %v1012 = vadd.f32 %v996, 2.0
    %v1013 = vadd.f32 %v997, 2.0
    %v1014 = vadd.f32 %v998, 2.0
    %v1015 = vadd.f32 %v999, 2.0
    %v1016 = vadd.f32 %v1000, 2.0
    %v1017 = vadd.f32 %v1001, 2.0
    %v1018 = vadd.f32 %v1002, 2.0
    %v1019 = vadd.f32 %v1003, 2.0
    %v1020 = vrcp.pop %v1012
    %v1021 = vrcp.pop %v1013
    %v1022 = vrcp.pop %v1014
    %v1023 = vrcp.pop %v1015
    %v1024 = vrcp.pop %v1016
    %v1025 = vrcp.pop %v1017
    %v1026 = vrcp.pop %v1018
    %v1027 = vrcp.pop %v1019
    %v1028 = vmul.f32 %v1004, %v1020
    %v1029 = vmul.f32 %v1005, %v1021
    %v1030 = vmul.f32 %v1006, %v1022
    %v1031 = vmul.f32 %v1007, %v1023
    %v1032 = vmul.f32 %v1008, %v1024
    %v1033 = vmul.f32 %v1009, %v1025
    %v1034 = vmul.f32 %v1010, %v1026
    %v1035 = vmul.f32 %v1011, %v1027
    %v1036 = vpack.c.bf16 %v1029, %v1028
    %v1037 = vpack.c.bf16 %v1031, %v1030
    %v1038 = vpack.c.bf16 %v1033, %v1032
    %v1039 = vpack.c.bf16 %v1035, %v1034
    %1040 = vmatprep.subr.bf16.mxu0 0
    %1041 = vmatpush1.bf16.msra.mxu0 %v1036
    %1042 = vmatprep.subr.bf16.mxu0 0
    %1043 = vmatpush1.bf16.msra.mxu0 %v1037
    %1044 = vmatprep.subr.bf16.mxu0 0
    %1045 = vmatpush1.bf16.msra.mxu0 %v1038
    %1046 = vmatprep.subr.bf16.mxu0 0
    %1047 = vmatpush1.bf16.msra.mxu0 %v1039
    %1048 = vmatprep.subr.bf16.mxu0 0
    %1049 = vmatpush1.bf16.msra.mxu0 0
    %1050 = vmatprep.subr.bf16.mxu0 0
    %1051 = vmatpush1.bf16.msra.mxu0 0
    %1052 = vmatprep.subr.bf16.mxu0 0
    %1053 = vmatpush1.bf16.msra.mxu0 0
    %1054 = vmatprep.subr.bf16.mxu0 0
    %1055 = vmatpush1.bf16.msra.mxu0 0
    %1056 = vmatprep.subr.bf16.mxu0 0
    %1057 = vmatpush1.bf16.msra.mxu0 0
    %1058 = vmatprep.subr.bf16.mxu0 0
    %1059 = vmatpush1.bf16.msra.mxu0 0
    %1060 = vmatprep.subr.bf16.mxu0 0
    %1061 = vmatpush1.bf16.msra.mxu0 0
    %1062 = vmatprep.subr.bf16.mxu0 0
    %1063 = vmatpush1.bf16.msra.mxu0 0
    %1064 = vmatprep.subr.bf16.mxu0 0
    %1065 = vmatpush1.bf16.msra.mxu0 0
    %1066 = vmatprep.subr.bf16.mxu0 0
    %1067 = vmatpush1.bf16.msra.mxu0 0
    %1068 = vmatprep.subr.bf16.mxu0 0
    %1069 = vmatpush1.bf16.msra.mxu0 0
    %1070 = vmatprep.subr.bf16.mxu0 0
    %1071 = vmatpush1.bf16.msra.mxu0 0
    %1072 = vmatprep.mubr.bf16.mxu0 0
    %1073 = vmatmul.mubr.bf16.gmra.mrb[0].mxu0 %v309
    %v1074 = vpop.f32.mrb[0].mxu0
    %v1075 = vadd.f32 %v58, %v1074
    %v1076 = vpop.f32.mrb[0].mxu0
    %v1077 = vpop.f32.mrb[0].mxu0
    %v1078 = vadd.f32 %v63, %v1077
    %v1079 = vpop.f32.mrb[0].mxu0
    %1080 = vdwg.mxu0
    %v1081 = vmul.f32 %v1075, %v51
    %v1082 = vmul.f32 %v1078, %v51
    %v1083 = vmul.f32 %v854, 0.53092045
    %v1084 = vmul.f32 %v855, 0.53092045
    %v1085 = vmul.f32 %v1081, 0.3424469
    %v1086 = vmul.f32 %v1082, 0.3424469
    %v1087 = vadd.f32 %v1083, %v1085
    %v1088 = vadd.f32 %v1084, %v1086
    %v1089 = vsub.f32 %v854, %v1087
    %v1090 = vsub.f32 %v855, %v1088
    %v1091 = vmul.f32 %v1089, 2.1277544
    %v1092 = vmul.f32 %v1090, 2.1277544
    %v1093 = vmul.f32 %v850, 0.5
    %v1094 = vmul.f32 %v851, 0.5
    %v1095 = vmul.f32 %v1091, 0.5
    %v1096 = vmul.f32 %v1092, 0.5
    %v1097 = vadd.f32 %v1093, %v1095
    %v1098 = vadd.f32 %v1094, %v1096
    %v1099 = vmul.f32 %v1097, -9.253222
    %v1100 = vmul.f32 %v1098, -9.253222
    %v1101 = vadd.f32 %v613, %v1099
    %v1102 = vadd.f32 %v614, %v1100
    %v1103 = vmul.f32 %v1101, 1.4572858
    %v1104 = vmul.f32 %v1102, 1.4572858
    %v1105 = vpack.c.bf16 %v1104, %v1103
    %1106 = vmatprep.subr.bf16.mxu0 0
    %1107 = vmatpush1.bf16.msra.mxu0 %v1105
    %1108 = vmatprep.subr.bf16.mxu0 0
    %1109 = vmatpush1.bf16.msra.mxu0 0
    %1110 = vmatprep.subr.bf16.mxu0 0
    %1111 = vmatpush1.bf16.msra.mxu0 0
    %1112 = vmatprep.subr.bf16.mxu0 0
    %1113 = vmatpush1.bf16.msra.mxu0 0
    %1114 = vmatprep.subr.bf16.mxu0 0
    %1115 = vmatpush1.bf16.msra.mxu0 0
    %1116 = vmatprep.subr.bf16.mxu0 0
    %1117 = vmatpush1.bf16.msra.mxu0 0
    %1118 = vmatprep.subr.bf16.mxu0 0
    %1119 = vmatpush1.bf16.msra.mxu0 0
    %1120 = vmatprep.subr.bf16.mxu0 0
    %1121 = vmatpush1.bf16.msra.mxu0 0
    %1122 = vmatprep.subr.bf16.mxu0 0
    %1123 = vmatpush1.bf16.msra.mxu0 0
    %1124 = vmatprep.subr.bf16.mxu0 0
    %1125 = vmatpush1.bf16.msra.mxu0 0
    %1126 = vmatprep.subr.bf16.mxu0 0
    %1127 = vmatpush1.bf16.msra.mxu0 0
    %1128 = vmatprep.subr.bf16.mxu0 0
    %1129 = vmatpush1.bf16.msra.mxu0 0
    %1130 = vmatprep.subr.bf16.mxu0 0
    %1131 = vmatpush1.bf16.msra.mxu0 0
    %1132 = vmatprep.subr.bf16.mxu0 0
    %1133 = vmatpush1.bf16.msra.mxu0 0
    %1134 = vmatprep.subr.bf16.mxu0 0
    %1135 = vmatpush1.bf16.msra.mxu0 0
    %1136 = vmatprep.subr.bf16.mxu0 0
    %1137 = vmatpush1.bf16.msra.mxu0 0
    %1138 = vmatprep.mubr.bf16.mxu0 0
    %1139 = vmatmul.mubr.bf16.gmra.mrb[0].mxu0 %v102
    %v1140 = vpop.f32.mrb[0].mxu0
    %v1141 = vadd.f32 %v28, %v1140
    %v1142 = vpop.f32.mrb[0].mxu0
    %v1143 = vpop.f32.mrb[0].mxu0
    %v1144 = vadd.f32 %v29, %v1143
    %v1145 = vpop.f32.mrb[0].mxu0
    %1146 = vmatprep.mubr.bf16.mxu0 0
    %1147 = vmatmul.mubr.bf16.gmra.mrb[0].mxu0 %v105
    %v1148 = vpop.f32.mrb[0].mxu0
    %v1149 = vadd.f32 %v30, %v1148
    %v1150 = vpop.f32.mrb[0].mxu0
    %v1151 = vpop.f32.mrb[0].mxu0
    %v1152 = vadd.f32 %v31, %v1151
    %v1153 = vpop.f32.mrb[0].mxu0
    %1154 = vmatprep.mubr.bf16.mxu0 0
    %1155 = vmatmul.mubr.bf16.gmra.mrb[0].mxu0 %v108
    %v1156 = vpop.f32.mrb[0].mxu0
    %v1157 = vadd.f32 %v32, %v1156
    %v1158 = vpop.f32.mrb[0].mxu0
    %v1159 = vpop.f32.mrb[0].mxu0
    %v1160 = vadd.f32 %v33, %v1159
    %v1161 = vpop.f32.mrb[0].mxu0
    %1162 = vmatprep.mubr.bf16.mxu0 0
    %1163 = vmatmul.mubr.bf16.gmra.mrb[0].mxu0 %v111
    %v1164 = vpop.f32.mrb[0].mxu0
    %v1165 = vadd.f32 %v34, %v1164
    %v1166 = vpop.f32.mrb[0].mxu0
    %v1167 = vpop.f32.mrb[0].mxu0
    %v1168 = vadd.f32 %v35, %v1167
    %v1169 = vpop.f32.mrb[0].mxu0
    %1170 = vdwg.mxu0
    %1171 = vset.pattern.permute.xlu0 4
    %1172 = vperm.xlu0 %1171, %v69
    %v1173 = vpop.permute.xlu0 %1172
    %1175 = vset.pattern.permute.xlu0 4
    %1176 = vperm.xlu0 %1175, %v70
    %v1177 = vpop.permute.xlu0 %1176
    %1179 = vset.pattern.permute.xlu0 4
    %1180 = vperm.xlu0 %1179, %v71
    %v1181 = vpop.permute.xlu0 %1180
    %1183 = vset.pattern.permute.xlu0 4
    %1184 = vperm.xlu0 %1183, %v72
    %v1185 = vpop.permute.xlu0 %1184
    %1187 = vset.pattern.permute.xlu0 4
    %1188 = vperm.xlu0 %1187, %v73
    %v1189 = vpop.permute.xlu0 %1188
    %1191 = vset.pattern.permute.xlu0 4
    %1192 = vperm.xlu0 %1191, %v74
    %v1193 = vpop.permute.xlu0 %1192
    %1195 = vset.pattern.permute.xlu0 4
    %1196 = vperm.xlu0 %1195, %v75
    %v1197 = vpop.permute.xlu0 %1196
    %1199 = vset.pattern.permute.xlu0 4
    %1200 = vperm.xlu0 %1199, %v76
    %v1201 = vpop.permute.xlu0 %1200
    %v1203 = vadd.f32 %v1141, %v1173
    %v1204 = vadd.f32 %v1144, %v1177
    %v1205 = vadd.f32 %v1149, %v1181
    %v1206 = vadd.f32 %v1152, %v1185
    %v1207 = vadd.f32 %v1157, %v1189
    %v1208 = vadd.f32 %v1160, %v1193
    %v1209 = vadd.f32 %v1165, %v1197
    %v1210 = vadd.f32 %v1168, %v1201
    %v1211 = vmin.f32 %v1203, 20.0
    %v1212 = vmin.f32 %v1204, 20.0
    %v1213 = vmin.f32 %v1205, 20.0
    %v1214 = vmin.f32 %v1206, 20.0
    %v1215 = vmin.f32 %v1207, 20.0
    %v1216 = vmin.f32 %v1208, 20.0
    %v1217 = vmin.f32 %v1209, 20.0
    %v1218 = vmin.f32 %v1210, 20.0
    %v1219 = vmul.f32 %v1211, 1.442695
    %v1220 = vpow.pop %v1219
    %v1221 = vmul.f32 %v1212, 1.442695
    %v1222 = vpow.pop %v1221
    %v1223 = vmul.f32 %v1213, 1.442695
    %v1224 = vpow.pop %v1223
    %v1225 = vmul.f32 %v1214, 1.442695
    %v1226 = vpow.pop %v1225
    %v1227 = vmul.f32 %v1215, 1.442695
    %v1228 = vpow.pop %v1227
    %v1229 = vmul.f32 %v1216, 1.442695
    %v1230 = vpow.pop %v1229
    %v1231 = vmul.f32 %v1217, 1.442695
    %v1232 = vpow.pop %v1231
    %v1233 = vmul.f32 %v1218, 1.442695
    %v1234 = vpow.pop %v1233
    %v1235 = vadd.f32 %v1220, 2.0
    %v1236 = vadd.f32 %v1222, 2.0
    %v1237 = vadd.f32 %v1224, 2.0
    %v1238 = vadd.f32 %v1226, 2.0
    %v1239 = vadd.f32 %v1228, 2.0
    %v1240 = vadd.f32 %v1230, 2.0
    %v1241 = vadd.f32 %v1232, 2.0
    %v1242 = vadd.f32 %v1234, 2.0
    %v1243 = vmul.f32 %v1220, %v1235
    %v1244 = vmul.f32 %v1222, %v1236
    %v1245 = vmul.f32 %v1224, %v1237
    %v1246 = vmul.f32 %v1226, %v1238
    %v1247 = vmul.f32 %v1228, %v1239
    %v1248 = vmul.f32 %v1230, %v1240
    %v1249 = vmul.f32 %v1232, %v1241
    %v1250 = vmul.f32 %v1234, %v1242
    %v1251 = vmul.f32 %v1203, %v1243
    %v1252 = vmul.f32 %v1204, %v1244
    %v1253 = vmul.f32 %v1205, %v1245
    %v1254 = vmul.f32 %v1206, %v1246
    %v1255 = vmul.f32 %v1207, %v1247
    %v1256 = vmul.f32 %v1208, %v1248
    %v1257 = vmul.f32 %v1209, %v1249
    %v1258 = vmul.f32 %v1210, %v1250
    %v1259 = vadd.f32 %v1243, 2.0
    %v1260 = vadd.f32 %v1244, 2.0
    %v1261 = vadd.f32 %v1245, 2.0
    %v1262 = vadd.f32 %v1246, 2.0
    %v1263 = vadd.f32 %v1247, 2.0
    %v1264 = vadd.f32 %v1248, 2.0
    %v1265 = vadd.f32 %v1249, 2.0
    %v1266 = vadd.f32 %v1250, 2.0
    %v1267 = vrcp.pop %v1259
    %v1268 = vrcp.pop %v1260
    %v1269 = vrcp.pop %v1261
    %v1270 = vrcp.pop %v1262
    %v1271 = vrcp.pop %v1263
    %v1272 = vrcp.pop %v1264
    %v1273 = vrcp.pop %v1265
    %v1274 = vrcp.pop %v1266
    %v1275 = vmul.f32 %v1251, %v1267
    %v1276 = vmul.f32 %v1252, %v1268
    %v1277 = vmul.f32 %v1253, %v1269
    %v1278 = vmul.f32 %v1254, %v1270
    %v1279 = vmul.f32 %v1255, %v1271
    %v1280 = vmul.f32 %v1256, %v1272
    %v1281 = vmul.f32 %v1257, %v1273
    %v1282 = vmul.f32 %v1258, %v1274
    %v1283 = vpack.c.bf16 %v1276, %v1275
    %v1284 = vpack.c.bf16 %v1278, %v1277
    %v1285 = vpack.c.bf16 %v1280, %v1279
    %v1286 = vpack.c.bf16 %v1282, %v1281
    %1287 = vmatprep.subr.bf16.mxu0 0
    %1288 = vmatpush1.bf16.msra.mxu0 %v1283
    %1289 = vmatprep.subr.bf16.mxu0 0
    %1290 = vmatpush1.bf16.msra.mxu0 %v1284
    %1291 = vmatprep.subr.bf16.mxu0 0
    %1292 = vmatpush1.bf16.msra.mxu0 %v1285
    %1293 = vmatprep.subr.bf16.mxu0 0
    %1294 = vmatpush1.bf16.msra.mxu0 %v1286
    %1295 = vmatprep.subr.bf16.mxu0 0
    %1296 = vmatpush1.bf16.msra.mxu0 0
    %1297 = vmatprep.subr.bf16.mxu0 0
    %1298 = vmatpush1.bf16.msra.mxu0 0
    %1299 = vmatprep.subr.bf16.mxu0 0
    %1300 = vmatpush1.bf16.msra.mxu0 0
    %1301 = vmatprep.subr.bf16.mxu0 0
    %1302 = vmatpush1.bf16.msra.mxu0 0
    %1303 = vmatprep.subr.bf16.mxu0 0
    %1304 = vmatpush1.bf16.msra.mxu0 0
    %1305 = vmatprep.subr.bf16.mxu0 0
    %1306 = vmatpush1.bf16.msra.mxu0 0
    %1307 = vmatprep.subr.bf16.mxu0 0
    %1308 = vmatpush1.bf16.msra.mxu0 0
    %1309 = vmatprep.subr.bf16.mxu0 0
    %1310 = vmatpush1.bf16.msra.mxu0 0
    %1311 = vmatprep.subr.bf16.mxu0 0
    %1312 = vmatpush1.bf16.msra.mxu0 0
    %1313 = vmatprep.subr.bf16.mxu0 0
    %1314 = vmatpush1.bf16.msra.mxu0 0
    %1315 = vmatprep.subr.bf16.mxu0 0
    %1316 = vmatpush1.bf16.msra.mxu0 0
    %1317 = vmatprep.subr.bf16.mxu0 0
    %1318 = vmatpush1.bf16.msra.mxu0 0
    %1319 = vmatprep.mubr.bf16.mxu0 0
    %1320 = vmatmul.mubr.bf16.gmra.mrb[0].mxu0 %v309
    %v1321 = vpop.f32.mrb[0].mxu0
    %v1322 = vadd.f32 %v58, %v1321
    %v1323 = vpop.f32.mrb[0].mxu0
    %v1324 = vpop.f32.mrb[0].mxu0
    %v1325 = vadd.f32 %v63, %v1324
    %v1326 = vpop.f32.mrb[0].mxu0
    %1327 = vdwg.mxu0
    %v1328 = vmul.f32 %v1322, %v51
    %v1329 = vmul.f32 %v1325, %v51
    %v1330 = vmul.f32 %v1101, 0.53092045
    %v1331 = vmul.f32 %v1102, 0.53092045
    %v1332 = vmul.f32 %v1328, 0.3424469
    %v1333 = vmul.f32 %v1329, 0.3424469
    %v1334 = vadd.f32 %v1330, %v1332
    %v1335 = vadd.f32 %v1331, %v1333
    %v1336 = vsub.f32 %v1101, %v1334
    %v1337 = vsub.f32 %v1102, %v1335
    %v1338 = vmul.f32 %v1336, 2.1277544
    %v1339 = vmul.f32 %v1337, 2.1277544
    %v1340 = vmul.f32 %v1338, -0.46797904
    %v1341 = vmul.f32 %v1339, -0.46797904
    %v1342 = vadd.f32 %v1101, %v1340
    %v1343 = vadd.f32 %v1102, %v1341
    %v1344 = vmul.f32 %v1342, 1.999984
    %v1345 = vmul.f32 %v1343, 1.999984
    %v1346 = vpack.c.bf16 %v1345, %v1344
    %1347 = vmatprep.subr.bf16.mxu0 0
    %1348 = vmatpush1.bf16.msra.mxu0 %v1346
    %1349 = vmatprep.subr.bf16.mxu0 0
    %1350 = vmatpush1.bf16.msra.mxu0 0
    %1351 = vmatprep.subr.bf16.mxu0 0
    %1352 = vmatpush1.bf16.msra.mxu0 0
    %1353 = vmatprep.subr.bf16.mxu0 0
    %1354 = vmatpush1.bf16.msra.mxu0 0
    %1355 = vmatprep.subr.bf16.mxu0 0
    %1356 = vmatpush1.bf16.msra.mxu0 0
    %1357 = vmatprep.subr.bf16.mxu0 0
    %1358 = vmatpush1.bf16.msra.mxu0 0
    %1359 = vmatprep.subr.bf16.mxu0 0
    %1360 = vmatpush1.bf16.msra.mxu0 0
    %1361 = vmatprep.subr.bf16.mxu0 0
    %1362 = vmatpush1.bf16.msra.mxu0 0
    %1363 = vmatprep.subr.bf16.mxu0 0
    %1364 = vmatpush1.bf16.msra.mxu0 0
    %1365 = vmatprep.subr.bf16.mxu0 0
    %1366 = vmatpush1.bf16.msra.mxu0 0
    %1367 = vmatprep.subr.bf16.mxu0 0
    %1368 = vmatpush1.bf16.msra.mxu0 0
    %1369 = vmatprep.subr.bf16.mxu0 0
    %1370 = vmatpush1.bf16.msra.mxu0 0
    %1371 = vmatprep.subr.bf16.mxu0 0
    %1372 = vmatpush1.bf16.msra.mxu0 0
    %1373 = vmatprep.subr.bf16.mxu0 0
    %1374 = vmatpush1.bf16.msra.mxu0 0
    %1375 = vmatprep.subr.bf16.mxu0 0
    %1376 = vmatpush1.bf16.msra.mxu0 0
    %1377 = vmatprep.subr.bf16.mxu0 0
    %1378 = vmatpush1.bf16.msra.mxu0 0
    %1379 = vmatprep.mubr.bf16.mxu0 0
    %1380 = vmatmul.mubr.bf16.gmra.mrb[0].mxu0 %v102
    %v1381 = vpop.f32.mrb[0].mxu0
    %v1382 = vadd.f32 %v28, %v1381
    %v1383 = vpop.f32.mrb[0].mxu0
    %v1384 = vpop.f32.mrb[0].mxu0
    %v1385 = vadd.f32 %v29, %v1384
    %v1386 = vpop.f32.mrb[0].mxu0
    %1387 = vmatprep.mubr.bf16.mxu0 0
    %1388 = vmatmul.mubr.bf16.gmra.mrb[0].mxu0 %v105
    %v1389 = vpop.f32.mrb[0].mxu0
    %v1390 = vadd.f32 %v30, %v1389
    %v1391 = vpop.f32.mrb[0].mxu0
    %v1392 = vpop.f32.mrb[0].mxu0
    %v1393 = vadd.f32 %v31, %v1392
    %v1394 = vpop.f32.mrb[0].mxu0
    %1395 = vmatprep.mubr.bf16.mxu0 0
    %1396 = vmatmul.mubr.bf16.gmra.mrb[0].mxu0 %v108
    %v1397 = vpop.f32.mrb[0].mxu0
    %v1398 = vadd.f32 %v32, %v1397
    %v1399 = vpop.f32.mrb[0].mxu0
    %v1400 = vpop.f32.mrb[0].mxu0
    %v1401 = vadd.f32 %v33, %v1400
    %v1402 = vpop.f32.mrb[0].mxu0
    %1403 = vmatprep.mubr.bf16.mxu0 0
    %1404 = vmatmul.mubr.bf16.gmra.mrb[0].mxu0 %v111
    %v1405 = vpop.f32.mrb[0].mxu0
    %v1406 = vadd.f32 %v34, %v1405
    %v1407 = vpop.f32.mrb[0].mxu0
    %v1408 = vpop.f32.mrb[0].mxu0
    %v1409 = vadd.f32 %v35, %v1408
    %v1410 = vpop.f32.mrb[0].mxu0
    %1411 = vdwg.mxu0
    %1412 = vset.pattern.permute.xlu0 5
    %1413 = vperm.xlu0 %1412, %v69
    %v1414 = vpop.permute.xlu0 %1413
    %1416 = vset.pattern.permute.xlu0 5
    %1417 = vperm.xlu0 %1416, %v70
    %v1418 = vpop.permute.xlu0 %1417
    %1420 = vset.pattern.permute.xlu0 5
    %1421 = vperm.xlu0 %1420, %v71
    %v1422 = vpop.permute.xlu0 %1421
    %1424 = vset.pattern.permute.xlu0 5
    %1425 = vperm.xlu0 %1424, %v72
    %v1426 = vpop.permute.xlu0 %1425
    %1428 = vset.pattern.permute.xlu0 5
    %1429 = vperm.xlu0 %1428, %v73
    %v1430 = vpop.permute.xlu0 %1429
    %1432 = vset.pattern.permute.xlu0 5
    %1433 = vperm.xlu0 %1432, %v74
    %v1434 = vpop.permute.xlu0 %1433
    %1436 = vset.pattern.permute.xlu0 5
    %1437 = vperm.xlu0 %1436, %v75
    %v1438 = vpop.permute.xlu0 %1437
    %1440 = vset.pattern.permute.xlu0 5
    %1441 = vperm.xlu0 %1440, %v76
    %v1442 = vpop.permute.xlu0 %1441
    %v1444 = vadd.f32 %v1382, %v1414
    %v1445 = vadd.f32 %v1385, %v1418
    %v1446 = vadd.f32 %v1390, %v1422
    %v1447 = vadd.f32 %v1393, %v1426
    %v1448 = vadd.f32 %v1398, %v1430
    %v1449 = vadd.f32 %v1401, %v1434
    %v1450 = vadd.f32 %v1406, %v1438
    %v1451 = vadd.f32 %v1409, %v1442
    %v1452 = vmin.f32 %v1444, 20.0
    %v1453 = vmin.f32 %v1445, 20.0
    %v1454 = vmin.f32 %v1446, 20.0
    %v1455 = vmin.f32 %v1447, 20.0
    %v1456 = vmin.f32 %v1448, 20.0
    %v1457 = vmin.f32 %v1449, 20.0
    %v1458 = vmin.f32 %v1450, 20.0
    %v1459 = vmin.f32 %v1451, 20.0
    %v1460 = vmul.f32 %v1452, 1.442695
    %v1461 = vpow.pop %v1460
    %v1462 = vmul.f32 %v1453, 1.442695
    %v1463 = vpow.pop %v1462
    %v1464 = vmul.f32 %v1454, 1.442695
    %v1465 = vpow.pop %v1464
    %v1466 = vmul.f32 %v1455, 1.442695
    %v1467 = vpow.pop %v1466
    %v1468 = vmul.f32 %v1456, 1.442695
    %v1469 = vpow.pop %v1468
    %v1470 = vmul.f32 %v1457, 1.442695
    %v1471 = vpow.pop %v1470
    %v1472 = vmul.f32 %v1458, 1.442695
    %v1473 = vpow.pop %v1472
    %v1474 = vmul.f32 %v1459, 1.442695
    %v1475 = vpow.pop %v1474
    %v1476 = vadd.f32 %v1461, 2.0
    %v1477 = vadd.f32 %v1463, 2.0
    %v1478 = vadd.f32 %v1465, 2.0
    %v1479 = vadd.f32 %v1467, 2.0
    %v1480 = vadd.f32 %v1469, 2.0
    %v1481 = vadd.f32 %v1471, 2.0
    %v1482 = vadd.f32 %v1473, 2.0
    %v1483 = vadd.f32 %v1475, 2.0
    %v1484 = vmul.f32 %v1461, %v1476
    %v1485 = vmul.f32 %v1463, %v1477
    %v1486 = vmul.f32 %v1465, %v1478
    %v1487 = vmul.f32 %v1467, %v1479
    %v1488 = vmul.f32 %v1469, %v1480
    %v1489 = vmul.f32 %v1471, %v1481
    %v1490 = vmul.f32 %v1473, %v1482
    %v1491 = vmul.f32 %v1475, %v1483
    %v1492 = vmul.f32 %v1444, %v1484
    %v1493 = vmul.f32 %v1445, %v1485
    %v1494 = vmul.f32 %v1446, %v1486
    %v1495 = vmul.f32 %v1447, %v1487
    %v1496 = vmul.f32 %v1448, %v1488
    %v1497 = vmul.f32 %v1449, %v1489
    %v1498 = vmul.f32 %v1450, %v1490
    %v1499 = vmul.f32 %v1451, %v1491
    %v1500 = vadd.f32 %v1484, 2.0
    %v1501 = vadd.f32 %v1485, 2.0
    %v1502 = vadd.f32 %v1486, 2.0
    %v1503 = vadd.f32 %v1487, 2.0
    %v1504 = vadd.f32 %v1488, 2.0
    %v1505 = vadd.f32 %v1489, 2.0
    %v1506 = vadd.f32 %v1490, 2.0
    %v1507 = vadd.f32 %v1491, 2.0
    %v1508 = vrcp.pop %v1500
    %v1509 = vrcp.pop %v1501
    %v1510 = vrcp.pop %v1502
    %v1511 = vrcp.pop %v1503
    %v1512 = vrcp.pop %v1504
    %v1513 = vrcp.pop %v1505
    %v1514 = vrcp.pop %v1506
    %v1515 = vrcp.pop %v1507
    %v1516 = vmul.f32 %v1492, %v1508
    %v1517 = vmul.f32 %v1493, %v1509
    %v1518 = vmul.f32 %v1494, %v1510
    %v1519 = vmul.f32 %v1495, %v1511
    %v1520 = vmul.f32 %v1496, %v1512
    %v1521 = vmul.f32 %v1497, %v1513
    %v1522 = vmul.f32 %v1498, %v1514
    %v1523 = vmul.f32 %v1499, %v1515
    %v1524 = vpack.c.bf16 %v1517, %v1516
    %v1525 = vpack.c.bf16 %v1519, %v1518
    %v1526 = vpack.c.bf16 %v1521, %v1520
    %v1527 = vpack.c.bf16 %v1523, %v1522
    %1528 = vmatprep.subr.bf16.mxu0 0
    %1529 = vmatpush1.bf16.msra.mxu0 %v1524
    %1530 = vmatprep.subr.bf16.mxu0 0
    %1531 = vmatpush1.bf16.msra.mxu0 %v1525
    %1532 = vmatprep.subr.bf16.mxu0 0
    %1533 = vmatpush1.bf16.msra.mxu0 %v1526
    %1534 = vmatprep.subr.bf16.mxu0 0
    %1535 = vmatpush1.bf16.msra.mxu0 %v1527
    %1536 = vmatprep.subr.bf16.mxu0 0
    %1537 = vmatpush1.bf16.msra.mxu0 0
    %1538 = vmatprep.subr.bf16.mxu0 0
    %1539 = vmatpush1.bf16.msra.mxu0 0
    %1540 = vmatprep.subr.bf16.mxu0 0
    %1541 = vmatpush1.bf16.msra.mxu0 0
    %1542 = vmatprep.subr.bf16.mxu0 0
    %1543 = vmatpush1.bf16.msra.mxu0 0
    %1544 = vmatprep.subr.bf16.mxu0 0
    %1545 = vmatpush1.bf16.msra.mxu0 0
    %1546 = vmatprep.subr.bf16.mxu0 0
    %1547 = vmatpush1.bf16.msra.mxu0 0
    %1548 = vmatprep.subr.bf16.mxu0 0
    %1549 = vmatpush1.bf16.msra.mxu0 0
    %1550 = vmatprep.subr.bf16.mxu0 0
    %1551 = vmatpush1.bf16.msra.mxu0 0
    %1552 = vmatprep.subr.bf16.mxu0 0
    %1553 = vmatpush1.bf16.msra.mxu0 0
    %1554 = vmatprep.subr.bf16.mxu0 0
    %1555 = vmatpush1.bf16.msra.mxu0 0
    %1556 = vmatprep.subr.bf16.mxu0 0
    %1557 = vmatpush1.bf16.msra.mxu0 0
    %1558 = vmatprep.subr.bf16.mxu0 0
    %1559 = vmatpush1.bf16.msra.mxu0 0
    %1560 = vmatprep.mubr.bf16.mxu0 0
    %1561 = vmatmul.mubr.bf16.gmra.mrb[0].mxu0 %v309
    %v1562 = vpop.f32.mrb[0].mxu0
    %v1563 = vadd.f32 %v58, %v1562
    %v1564 = vpop.f32.mrb[0].mxu0
    %v1565 = vpop.f32.mrb[0].mxu0
    %v1566 = vadd.f32 %v63, %v1565
    %v1567 = vpop.f32.mrb[0].mxu0
    %1568 = vdwg.mxu0
    %v1569 = vmul.f32 %v1563, %v51
    %v1570 = vmul.f32 %v1566, %v51
    %v1571 = vmul.f32 %v1342, 0.999984
    %v1572 = vmul.f32 %v1343, 0.999984
    %v1573 = vmul.f32 %v1569, 0.001999984
    %v1574 = vmul.f32 %v1570, 0.001999984
    %v1575 = vadd.f32 %v1571, %v1573
    %v1576 = vadd.f32 %v1572, %v1574
    %v1577 = vsub.f32 %v1342, %v1575
    %v1578 = vsub.f32 %v1343, %v1576
    %v1579 = vmul.f32 %v1577, 500.0
    %v1580 = vmul.f32 %v1578, 500.0
    %v1581 = vmul.f32 %v1338, 0.5
    %v1582 = vmul.f32 %v1339, 0.5
    %v1583 = vmul.f32 %v1579, 0.5
    %v1584 = vmul.f32 %v1580, 0.5
    %v1585 = vadd.f32 %v1581, %v1583
    %v1586 = vadd.f32 %v1582, %v1584
    %v1587 = vmul.f32 %v1585, -0.46797904
    %v1588 = vmul.f32 %v1586, -0.46797904
    %v1589 = vadd.f32 %v1101, %v1587
    %v1590 = vadd.f32 %v1102, %v1588
    %1591 = vst [vmem:[#allocation2] sm:$0xff] %v1589
    %1592 = vst [vmem:[#allocation2 + $0x8] sm:$0xff] %v1590
    // Predicated region
    $region30: #{tpu_custom_call.1} parent=1 // pred_check
      _
    $region31: #{tpu_custom_call.1} parent=1 // pred_check_branch
      %1594 = sbr.rel (0) target = $region33
    $region32: #{tpu_custom_call.1} parent=1 // pred_region
      %s1596 = ssub.s32 256, 256
      %1597 = vsyncadd [#allocation3], %s1596
      %s1598 = sshll.u32 [#allocation2], 4
      %s1599 = int_to_ptr.vmem [resolvable:$true] %s1598
      %1604 = dma.vmem_to_hbm [thread:$0]  %s1599, 256, %s7, [#allocation3], 128, 128, 8
    $region33: #{tpu_custom_call.1} parent=1 // pred_fallthru
      _
    // Predicated region
    $region34: #{tpu_custom_call.1} parent=1 // pred_check
      _
    $region35: #{tpu_custom_call.1} parent=1 // pred_check_branch
      %1606 = sbr.rel (0) target = $region37
    $region36: #{tpu_custom_call.1} parent=1 // pred_region
      %1607 = dma.done [#allocation3], 256
    $region37: #{tpu_custom_call.1} parent=1 // pred_fallthru
      _
    %1608 = vsyncpa [#allocation3], 1

</llo_original>
